<compile_context>
chip_gen: v7x
topology: tpu7x:2x2x1
jax: 0.10.0
libtpu: 0.0.40
codegen_flags: <defaults>
</compile_context>

<pallas_src>
import math
from functools import partial

import jax
import jax.numpy as jnp
from jax import lax
from jax.experimental import pallas as pl
from jax.experimental.pallas import tpu as pltpu

_VMEM_SPEC = pl.BlockSpec(memory_space=pltpu.MemorySpace.VMEM)


# ----------------------------------------------------------------------------------
# Pallas kernels
# ----------------------------------------------------------------------------------
def _bilstm_layer_kernel(x_ref, wih_ref, whh_f_ref, whh_b_ref, b_ref,
                         out_ref, xg_ref, hsf_ref, hsb_ref):
    """One bidirectional LSTM layer, time-major.

    Shapes:
      x_ref:     (L, B, Cin)        time-major input
      wih_ref:   (Cin, 8H)          [W_ih_fwd | W_ih_bwd], pre-transposed
      whh_*_ref: (H, 4H)            recurrent weights per direction, pre-transposed
      b_ref:     (1, 8H)            folded b_ih + b_hh per direction
      out_ref:   (L, B, 2H)         [h_fwd | h_bwd] features
      xg_ref:    (L, B, 8H)  f32    scratch: precomputed input gates
      hsf_ref / hsb_ref: (L, B, H)  scratch: per-direction hidden sequences
    PyTorch gate order: i, f, g, o.
    """
    L, B, Cin = x_ref.shape
    H = whh_f_ref.shape[0]
    H4 = 4 * H

    # (1) Input projection for every timestep and BOTH directions as one MXU matmul:
    #     M = L*B (batch folded into M), K = Cin, N = 8H.  Bias folded in here.
    x_flat = x_ref[...].reshape(L * B, Cin)
    xg = jnp.dot(x_flat, wih_ref[...], preferred_element_type=jnp.float32) + b_ref[...]
    xg_ref[...] = xg.reshape(L, B, 2 * H4)

    # Hoist recurrent weights out of the time loop (loop-invariant VMEM loads).
    whh_f = whh_f_ref[...]
    whh_b = whh_b_ref[...]

    def cell(g, c):
        i = jax.nn.sigmoid(g[:, 0:H])
        f = jax.nn.sigmoid(g[:, H:2 * H])
        gg = jnp.tanh(g[:, 2 * H:3 * H])
        o = jax.nn.sigmoid(g[:, 3 * H:4 * H])
        c_new = f * c + i * gg
        h_new = o * jnp.tanh(c_new)
        return h_new, c_new

    # (2) Sequential recurrence.  Forward walks t, backward walks L-1-t; both per step.
    def step(t, carry):
        h_f, c_f, h_b, c_b = carry
        tb = L - 1 - t
        g_f = xg_ref[t][:, 0:H4] + jnp.dot(h_f, whh_f, preferred_element_type=jnp.float32)
        g_b = xg_ref[tb][:, H4:2 * H4] + jnp.dot(h_b, whh_b, preferred_element_type=jnp.float32)
        h_f, c_f = cell(g_f, c_f)
        h_b, c_b = cell(g_b, c_b)
        hsf_ref[t] = h_f
        hsb_ref[tb] = h_b
        return h_f, c_f, h_b, c_b

    zeros = jnp.zeros((B, H), jnp.float32)
    lax.fori_loop(0, L, step, (zeros, zeros, zeros, zeros))

    # (3) Emit concatenated [fwd | bwd] features by writing slices directly (no concat).
    out_ref[:, :, 0:H] = hsf_ref[...].astype(out_ref.dtype)
    out_ref[:, :, H:2 * H] = hsb_ref[...].astype(out_ref.dtype)


def _head_kernel(y_ref, w_hid_ref, b_hid_ref, w_fc_ref, b_fc_ref, out_ref):
    """Fused classification head: Linear(2H,100) -> Linear(100,C) -> Softmax(dim=-1).

    y_ref:   (TL, B, 2H) time-major L-tile     out_ref: (TL, B, C)
    Batch folded into the matmul M dimension (M = TL*B).
    """
    TL, B, F = y_ref.shape
    C = out_ref.shape[-1]

    y = y_ref[...].reshape(TL * B, F)
    z = jnp.dot(y, w_hid_ref[...], preferred_element_type=jnp.float32) + b_hid_ref[...]
    logits = jnp.dot(z, w_fc_ref[...], preferred_element_type=jnp.float32) + b_fc_ref[...]

    m = jnp.max(logits, axis=-1, keepdims=True)
    e = jnp.exp(logits - m)
    probs = e / jnp.sum(e, axis=-1, keepdims=True)
    out_ref[...] = probs.reshape(TL, B, C).astype(out_ref.dtype)


# ----------------------------------------------------------------------------------
# pallas_call wrappers
# ----------------------------------------------------------------------------------
def bilstm_layer_call(x_tm, p):
    """x_tm: (L, B, Cin) time-major -> (L, B, 2H)."""
    L, B, _ = x_tm.shape
    H = p['whh_f'].shape[0]
    return pl.pallas_call(
        _bilstm_layer_kernel,
        out_shape=jax.ShapeDtypeStruct((L, B, 2 * H), x_tm.dtype),
        in_specs=[_VMEM_SPEC] * 5,
        out_specs=_VMEM_SPEC,
        scratch_shapes=[
            pltpu.VMEM((L, B, 8 * H), jnp.float32),   # precomputed input gates
            pltpu.VMEM((L, B, H), jnp.float32),       # forward hidden sequence
            pltpu.VMEM((L, B, H), jnp.float32),       # backward hidden sequence
        ],
    )(x_tm, p['wih'], p['whh_f'], p['whh_b'], p['b'])


def head_call(y_tm, p, tile_l=128):
    """y_tm: (L, B, 2H) time-major -> softmax probabilities (L, B, num_cls)."""
    L, B, F = y_tm.shape
    C = p['w_fc'].shape[1]
    TL = min(tile_l, L)
    return pl.pallas_call(
        _head_kernel,
        out_shape=jax.ShapeDtypeStruct((L, B, C), y_tm.dtype),
        grid=(pl.cdiv(L, TL),),
        in_specs=[
            pl.BlockSpec((TL, B, F), lambda i: (i, 0, 0)),
            pl.BlockSpec(p['w_hid'].shape, lambda i: (0, 0)),
            pl.BlockSpec(p['b_hid'].shape, lambda i: (0, 0)),
            pl.BlockSpec(p['w_fc'].shape, lambda i: (0, 0)),
            pl.BlockSpec(p['b_fc'].shape, lambda i: (0, 0)),
        ],
        out_specs=pl.BlockSpec((TL, B, C), lambda i: (i, 0, 0)),
        compiler_params=pltpu.CompilerParams(dimension_semantics=("parallel",)),
    )(y_tm, p['w_hid'], p['b_hid'], p['w_fc'], p['b_fc'])


# ----------------------------------------------------------------------------------
# Parameter initialization (deterministic, synthetic; mirrors nn.LSTM / nn.Linear shapes)
# ----------------------------------------------------------------------------------
def init_fel_bilstm(key, size_in, num_cls, hidden=60, num_layers=2):
    """Weights stored pre-transposed: W_ih -> (Cin, 4H), W_hh -> (H, 4H); biases folded."""
    params = {'lstm': [], 'head': {}}
    keys = jax.random.split(key, num_layers + 1)
    bound = 1.0 / math.sqrt(hidden)

    def u(k, shape, b):
        return jax.random.uniform(k, shape, jnp.float32, -b, b)

    for layer in range(num_layers):
        cin = size_in if layer == 0 else 2 * hidden
        k = jax.random.split(keys[layer], 8)
        wih_f = u(k[0], (cin, 4 * hidden), bound)
        wih_b = u(k[1], (cin, 4 * hidden), bound)
        whh_f = u(k[2], (hidden, 4 * hidden), bound)
        whh_b = u(k[3], (hidden, 4 * hidden), bound)
        b_f = u(k[4], (4 * hidden,), bound) + u(k[5], (4 * hidden,), bound)  # b_ih + b_hh
        b_b = u(k[6], (4 * hidden,), bound) + u(k[7], (4 * hidden,), bound)
        params['lstm'].append({
            'wih': jnp.concatenate([wih_f, wih_b], axis=1),              # (cin, 8H)
            'whh_f': whh_f,
            'whh_b': whh_b,
            'b': jnp.concatenate([b_f, b_b]).reshape(1, 8 * hidden),     # (1, 8H)
        })

    kh = jax.random.split(keys[-1], 4)
    bh = 1.0 / math.sqrt(2 * hidden)
    bf = 1.0 / math.sqrt(100)
    params['head'] = {
        'w_hid': u(kh[0], (2 * hidden, 100), bh),
        'b_hid': u(kh[1], (1, 100), bh),
        'w_fc': u(kh[2], (100, num_cls), bf),
        'b_fc': u(kh[3], (1, num_cls), bf),
    }
    return params


# ----------------------------------------------------------------------------------
# Full model forward
# ----------------------------------------------------------------------------------
@jax.jit
def fel_bilstm_forward(x_bls, params):
    """x_bls: (B, L, size_in), batch_first like PyTorch -> probs (B, L, num_cls)."""
    x = jnp.transpose(x_bls, (1, 0, 2)).astype(jnp.float32)   # time-major (L, B, C)
    for layer_params in params['lstm']:
        x = bilstm_layer_call(x, layer_params)
    probs = head_call(x, params['head'])
    return jnp.transpose(probs, (1, 0, 2))                    # back to (B, L, num_cls)


# ----------------------------------------------------------------------------------
# Pure-JAX reference (mirrors PyTorch nn.LSTM math; gate order i, f, g, o)
# ----------------------------------------------------------------------------------
def _ref_lstm_direction(x_tm, wih, whh, b, reverse):
    L, B, _ = x_tm.shape
    H = whh.shape[0]
    xs = x_tm[::-1] if reverse else x_tm

    def step(carry, xt):
        h, c = carry
        g = xt @ wih + h @ whh + b
        i = jax.nn.sigmoid(g[:, 0:H])
        f = jax.nn.sigmoid(g[:, H:2 * H])
        gg = jnp.tanh(g[:, 2 * H:3 * H])
        o = jax.nn.sigmoid(g[:, 3 * H:4 * H])
        c = f * c + i * gg
        h = o * jnp.tanh(c)
        return (h, c), h

    init = (jnp.zeros((B, H), jnp.float32), jnp.zeros((B, H), jnp.float32))
    _, hs = lax.scan(step, init, xs)
    return hs[::-1] if reverse else hs


def ref_forward(x_bls, params):
    x = jnp.transpose(x_bls, (1, 0, 2)).astype(jnp.float32)
    for p in params['lstm']:
        H4 = p['whh_f'].shape[1]
        b = p['b'][0]
        y_f = _ref_lstm_direction(x, p['wih'][:, :H4], p['whh_f'], b[:H4], reverse=False)
        y_b = _ref_lstm_direction(x, p['wih'][:, H4:], p['whh_b'], b[H4:], reverse=True)
        x = jnp.concatenate([y_f, y_b], axis=-1)
    hp = params['head']
    z = x @ hp['w_hid'] + hp['b_hid']
    z = z @ hp['w_fc'] + hp['b_fc']
    return jnp.transpose(jax.nn.softmax(z, axis=-1), (1, 0, 2))


# ----------------------------------------------------------------------------------
if __name__ == "__main__":
    B, L, SIZE_IN, NUM_CLS = 2, 16, 4, 5

    key = jax.random.PRNGKey(0)
    kx, kp = jax.random.split(key)
    x = jax.random.normal(kx, (B, L, SIZE_IN), jnp.float32)
    params = init_fel_bilstm(kp, SIZE_IN, NUM_CLS)

    out = fel_bilstm_forward(x, params)
    out = jax.block_until_ready(out)

    assert out.shape == (B, L, NUM_CLS), out.shape
    assert bool(jnp.all(jnp.isfinite(out)))
    assert bool(jnp.all(out >= 0.0))
    row_sums = jnp.sum(out, axis=-1)
    assert bool(jnp.all(jnp.abs(row_sums - 1.0) < 1e-4))       # softmax rows sum to 1

    ref = ref_forward(x, params)
    assert bool(jnp.allclose(out, ref, rtol=1e-2, atol=5e-3)), \
        float(jnp.max(jnp.abs(out - ref)))

    print("KERNEL_OK")
</pallas_src>

<mosaic_0001>
module attributes {stable_mosaic.version = 11 : i64} {
  func.func @_bilstm_layer_kernel(%arg0: memref<16x2x120xf32, #tpu.memory_space<vmem>>, %arg1: memref<120x480xf32, #tpu.memory_space<vmem>>, %arg2: memref<60x240xf32, #tpu.memory_space<vmem>>, %arg3: memref<60x240xf32, #tpu.memory_space<vmem>>, %arg4: memref<1x480xf32, #tpu.memory_space<vmem>>, %arg5: memref<16x2x120xf32, #tpu.memory_space<vmem>>, %arg6: memref<16x2x480xf32, #tpu.memory_space<vmem>>, %arg7: memref<16x2x60xf32, #tpu.memory_space<vmem>>, %arg8: memref<16x2x60xf32, #tpu.memory_space<vmem>>) attributes {dimension_semantics = [], scalar_prefetch = 0 : i64, scratch_operands = 3 : i64, tpu.core_type = #tpu.core_type<tc>} {
    %c0 = arith.constant 0 : index
    %c0_0 = arith.constant 0 : index
    %c0_1 = arith.constant 0 : index
    %0 = vector.load %arg0[%c0, %c0_0, %c0_1] : memref<16x2x120xf32, #tpu.memory_space<vmem>>, vector<16x2x120xf32>
    %1 = vector.shape_cast %0 : vector<16x2x120xf32> to vector<32x120xf32>
    %c0_2 = arith.constant 0 : index
    %c0_3 = arith.constant 0 : index
    %2 = vector.load %arg1[%c0_2, %c0_3] : memref<120x480xf32, #tpu.memory_space<vmem>>, vector<120x480xf32>
    %cst = arith.constant dense<0.000000e+00> : vector<32x480xf32>
    %3 = tpu.matmul %1, %2, %cst {dimension_numbers = #tpu.dot_dimension_numbers<[1], [0], [0], [1], [0, 0, 1, 1], [], []>} : vector<32x120xf32>, vector<120x480xf32>, vector<32x480xf32> -> vector<32x480xf32>
    %c0_4 = arith.constant 0 : index
    %c0_5 = arith.constant 0 : index
    %4 = vector.load %arg4[%c0_4, %c0_5] : memref<1x480xf32, #tpu.memory_space<vmem>>, vector<1x480xf32>
    %5 = vector.broadcast %4 : vector<1x480xf32> to vector<32x480xf32>
    %6 = arith.addf %3, %5 : vector<32x480xf32>
    %7 = vector.shape_cast %6 : vector<32x480xf32> to vector<16x2x480xf32>
    %c0_6 = arith.constant 0 : index
    %c0_7 = arith.constant 0 : index
    %c0_8 = arith.constant 0 : index
    %8 = vector.load %arg6[%c0_6, %c0_7, %c0_8] : memref<16x2x480xf32, #tpu.memory_space<vmem>>, vector<16x2x480xf32>
    tpu.vector_store %arg6[%c0_6, %c0_7, %c0_8], %7 {strides = array<i32>} : memref<16x2x480xf32, #tpu.memory_space<vmem>>, vector<16x2x480xf32>,
    %c0_9 = arith.constant 0 : index
    %c0_10 = arith.constant 0 : index
    %9 = vector.load %arg2[%c0_9, %c0_10] : memref<60x240xf32, #tpu.memory_space<vmem>>, vector<60x240xf32>
    %c0_11 = arith.constant 0 : index
    %c0_12 = arith.constant 0 : index
    %10 = vector.load %arg3[%c0_11, %c0_12] : memref<60x240xf32, #tpu.memory_space<vmem>>, vector<60x240xf32>
    %cst_13 = arith.constant 0.000000e+00 : f32
    %11 = vector.broadcast %cst_13 : f32 to vector<2x60xf32>
    %c0_i32 = arith.constant 0 : i32
    %c16_i32 = arith.constant 16 : i32
    %12 = arith.addi %c0_i32, %c16_i32 : i32
    %c1_i32 = arith.constant 1 : i32
    %13:4 = scf.for %arg9 = %c0_i32 to %12 step %c1_i32 iter_args(%arg10 = %11, %arg11 = %11, %arg12 = %11, %arg13 = %11) -> (vector<2x60xf32>, vector<2x60xf32>, vector<2x60xf32>, vector<2x60xf32>)  : i32 {
      %c15_i32 = arith.constant 15 : i32
      %18 = arith.subi %c15_i32, %arg9 : i32
      %19 = arith.index_cast %arg9 : i32 to index
      %c0_26 = arith.constant 0 : index
      %c0_27 = arith.constant 0 : index
      %20 = vector.load %arg6[%19, %c0_26, %c0_27] : memref<16x2x480xf32, #tpu.memory_space<vmem>>, vector<1x2x480xf32>
      %21 = vector.shape_cast %20 : vector<1x2x480xf32> to vector<2x480xf32>
      %22 = vector.extract_strided_slice %21 {offsets = [0, 0], sizes = [2, 240], strides = [1, 1]} : vector<2x480xf32> to vector<2x240xf32>
      %cst_28 = arith.constant dense<0.000000e+00> : vector<2x240xf32>
      %23 = tpu.matmul %arg10, %9, %cst_28 {dimension_numbers = #tpu.dot_dimension_numbers<[1], [0], [0], [1], [0, 0, 1, 1], [], []>} : vector<2x60xf32>, vector<60x240xf32>, vector<2x240xf32> -> vector<2x240xf32>
      %24 = arith.addf %22, %23 : vector<2x240xf32>
      %25 = arith.index_cast %18 : i32 to index
      %c0_29 = arith.constant 0 : index
      %c0_30 = arith.constant 0 : index
      %26 = vector.load %arg6[%25, %c0_29, %c0_30] : memref<16x2x480xf32, #tpu.memory_space<vmem>>, vector<1x2x480xf32>
      %27 = vector.shape_cast %26 : vector<1x2x480xf32> to vector<2x480xf32>
      %28 = vector.extract_strided_slice %27 {offsets = [0, 240], sizes = [2, 240], strides = [1, 1]} : vector<2x480xf32> to vector<2x240xf32>
      %cst_31 = arith.constant dense<0.000000e+00> : vector<2x240xf32>
      %29 = tpu.matmul %arg12, %10, %cst_31 {dimension_numbers = #tpu.dot_dimension_numbers<[1], [0], [0], [1], [0, 0, 1, 1], [], []>} : vector<2x60xf32>, vector<60x240xf32>, vector<2x240xf32> -> vector<2x240xf32>
      %30 = arith.addf %28, %29 : vector<2x240xf32>
      %31 = vector.extract_strided_slice %24 {offsets = [0, 0], sizes = [2, 60], strides = [1, 1]} : vector<2x240xf32> to vector<2x60xf32>
      %32 = arith.negf %31 : vector<2x60xf32>
      %33 = math.exp %32 : vector<2x60xf32>
      %cst_32 = arith.constant 1.000000e+00 : f32
      %34 = vector.broadcast %cst_32 : f32 to vector<2x60xf32>
      %35 = arith.addf %34, %33 : vector<2x60xf32>
      %36 = arith.divf %34, %35 : vector<2x60xf32>
      %37 = vector.extract_strided_slice %24 {offsets = [0, 60], sizes = [2, 60], strides = [1, 1]} : vector<2x240xf32> to vector<2x60xf32>
      %38 = arith.negf %37 : vector<2x60xf32>
      %39 = math.exp %38 : vector<2x60xf32>
      %cst_33 = arith.constant 1.000000e+00 : f32
      %40 = vector.broadcast %cst_33 : f32 to vector<2x60xf32>
      %41 = arith.addf %40, %39 : vector<2x60xf32>
      %42 = arith.divf %40, %41 : vector<2x60xf32>
      %43 = vector.extract_strided_slice %24 {offsets = [0, 120], sizes = [2, 60], strides = [1, 1]} : vector<2x240xf32> to vector<2x60xf32>
      %44 = math.tanh %43 : vector<2x60xf32>
      %45 = vector.extract_strided_slice %24 {offsets = [0, 180], sizes = [2, 60], strides = [1, 1]} : vector<2x240xf32> to vector<2x60xf32>
      %46 = arith.negf %45 : vector<2x60xf32>
      %47 = math.exp %46 : vector<2x60xf32>
      %cst_34 = arith.constant 1.000000e+00 : f32
      %48 = vector.broadcast %cst_34 : f32 to vector<2x60xf32>
      %49 = arith.addf %48, %47 : vector<2x60xf32>
      %50 = arith.divf %48, %49 : vector<2x60xf32>
      %51 = arith.mulf %42, %arg11 : vector<2x60xf32>
      %52 = arith.mulf %36, %44 : vector<2x60xf32>
      %53 = arith.addf %51, %52 : vector<2x60xf32>
      %54 = math.tanh %53 : vector<2x60xf32>
      %55 = arith.mulf %50, %54 : vector<2x60xf32>
      %56 = vector.extract_strided_slice %30 {offsets = [0, 0], sizes = [2, 60], strides = [1, 1]} : vector<2x240xf32> to vector<2x60xf32>
      %57 = arith.negf %56 : vector<2x60xf32>
      %58 = math.exp %57 : vector<2x60xf32>
      %cst_35 = arith.constant 1.000000e+00 : f32
      %59 = vector.broadcast %cst_35 : f32 to vector<2x60xf32>
      %60 = arith.addf %59, %58 : vector<2x60xf32>
      %61 = arith.divf %59, %60 : vector<2x60xf32>
      %62 = vector.extract_strided_slice %30 {offsets = [0, 60], sizes = [2, 60], strides = [1, 1]} : vector<2x240xf32> to vector<2x60xf32>
      %63 = arith.negf %62 : vector<2x60xf32>
      %64 = math.exp %63 : vector<2x60xf32>
      %cst_36 = arith.constant 1.000000e+00 : f32
      %65 = vector.broadcast %cst_36 : f32 to vector<2x60xf32>
      %66 = arith.addf %65, %64 : vector<2x60xf32>
      %67 = arith.divf %65, %66 : vector<2x60xf32>
      %68 = vector.extract_strided_slice %30 {offsets = [0, 120], sizes = [2, 60], strides = [1, 1]} : vector<2x240xf32> to vector<2x60xf32>
      %69 = math.tanh %68 : vector<2x60xf32>
      %70 = vector.extract_strided_slice %30 {offsets = [0, 180], sizes = [2, 60], strides = [1, 1]} : vector<2x240xf32> to vector<2x60xf32>
      %71 = arith.negf %70 : vector<2x60xf32>
      %72 = math.exp %71 : vector<2x60xf32>
      %cst_37 = arith.constant 1.000000e+00 : f32
      %73 = vector.broadcast %cst_37 : f32 to vector<2x60xf32>
      %74 = arith.addf %73, %72 : vector<2x60xf32>
      %75 = arith.divf %73, %74 : vector<2x60xf32>
      %76 = arith.mulf %67, %arg13 : vector<2x60xf32>
      %77 = arith.mulf %61, %69 : vector<2x60xf32>
      %78 = arith.addf %76, %77 : vector<2x60xf32>
      %79 = math.tanh %78 : vector<2x60xf32>
      %80 = arith.mulf %75, %79 : vector<2x60xf32>
      %81 = arith.index_cast %arg9 : i32 to index
      %c0_38 = arith.constant 0 : index
      %c0_39 = arith.constant 0 : index
      %82 = vector.load %arg7[%81, %c0_38, %c0_39] : memref<16x2x60xf32, #tpu.memory_space<vmem>>, vector<1x2x60xf32>
      %83 = vector.shape_cast %82 : vector<1x2x60xf32> to vector<2x60xf32>
      %84 = vector.shape_cast %55 : vector<2x60xf32> to vector<1x2x60xf32>
      tpu.vector_store %arg7[%81, %c0_38, %c0_39], %84 {strides = array<i32>} : memref<16x2x60xf32, #tpu.memory_space<vmem>>, vector<1x2x60xf32>,
      %85 = arith.index_cast %18 : i32 to index
      %c0_40 = arith.constant 0 : index
      %c0_41 = arith.constant 0 : index
      %86 = vector.load %arg8[%85, %c0_40, %c0_41] : memref<16x2x60xf32, #tpu.memory_space<vmem>>, vector<1x2x60xf32>
      %87 = vector.shape_cast %86 : vector<1x2x60xf32> to vector<2x60xf32>
      %88 = vector.shape_cast %80 : vector<2x60xf32> to vector<1x2x60xf32>
      tpu.vector_store %arg8[%85, %c0_40, %c0_41], %88 {strides = array<i32>} : memref<16x2x60xf32, #tpu.memory_space<vmem>>, vector<1x2x60xf32>,
      scf.yield %55, %53, %80, %78 : vector<2x60xf32>, vector<2x60xf32>, vector<2x60xf32>, vector<2x60xf32>
    }
    %c16_i32_14 = arith.constant 16 : i32
    %c0_15 = arith.constant 0 : index
    %c0_16 = arith.constant 0 : index
    %c0_17 = arith.constant 0 : index
    %14 = vector.load %arg7[%c0_15, %c0_16, %c0_17] : memref<16x2x60xf32, #tpu.memory_space<vmem>>, vector<16x2x60xf32>
    %c0_18 = arith.constant 0 : index
    %c0_19 = arith.constant 0 : index
    %c0_20 = arith.constant 0 : index
    %15 = vector.load %arg5[%c0_18, %c0_19, %c0_20] : memref<16x2x120xf32, #tpu.memory_space<vmem>>, vector<16x2x60xf32>
    tpu.vector_store %arg5[%c0_18, %c0_19, %c0_20], %14 {strides = array<i32>} : memref<16x2x120xf32, #tpu.memory_space<vmem>>, vector<16x2x60xf32>,
    %c0_21 = arith.constant 0 : index
    %c0_22 = arith.constant 0 : index
    %c0_23 = arith.constant 0 : index
    %16 = vector.load %arg8[%c0_21, %c0_22, %c0_23] : memref<16x2x60xf32, #tpu.memory_space<vmem>>, vector<16x2x60xf32>
    %c0_24 = arith.constant 0 : index
    %c0_25 = arith.constant 0 : index
    %c60 = arith.constant 60 : index
    %17 = vector.load %arg5[%c0_24, %c0_25, %c60] : memref<16x2x120xf32, #tpu.memory_space<vmem>>, vector<16x2x60xf32>
    tpu.vector_store %arg5[%c0_24, %c0_25, %c60], %16 {strides = array<i32>} : memref<16x2x120xf32, #tpu.memory_space<vmem>>, vector<16x2x60xf32>,
    return
  }
}

module attributes {stable_mosaic.version = 11 : i64} {
  func.func @_bilstm_layer_kernel(%arg0: memref<16x2x4xf32, #tpu.memory_space<vmem>>, %arg1: memref<4x480xf32, #tpu.memory_space<vmem>>, %arg2: memref<60x240xf32, #tpu.memory_space<vmem>>, %arg3: memref<60x240xf32, #tpu.memory_space<vmem>>, %arg4: memref<1x480xf32, #tpu.memory_space<vmem>>, %arg5: memref<16x2x120xf32, #tpu.memory_space<vmem>>, %arg6: memref<16x2x480xf32, #tpu.memory_space<vmem>>, %arg7: memref<16x2x60xf32, #tpu.memory_space<vmem>>, %arg8: memref<16x2x60xf32, #tpu.memory_space<vmem>>) attributes {dimension_semantics = [], scalar_prefetch = 0 : i64, scratch_operands = 3 : i64, tpu.core_type = #tpu.core_type<tc>} {
    %c0 = arith.constant 0 : index
    %c0_0 = arith.constant 0 : index
    %c0_1 = arith.constant 0 : index
    %0 = vector.load %arg0[%c0, %c0_0, %c0_1] : memref<16x2x4xf32, #tpu.memory_space<vmem>>, vector<16x2x4xf32>
    %1 = vector.shape_cast %0 : vector<16x2x4xf32> to vector<32x4xf32>
    %c0_2 = arith.constant 0 : index
    %c0_3 = arith.constant 0 : index
    %2 = vector.load %arg1[%c0_2, %c0_3] : memref<4x480xf32, #tpu.memory_space<vmem>>, vector<4x480xf32>
    %cst = arith.constant dense<0.000000e+00> : vector<32x480xf32>
    %3 = tpu.matmul %1, %2, %cst {dimension_numbers = #tpu.dot_dimension_numbers<[1], [0], [0], [1], [0, 0, 1, 1], [], []>} : vector<32x4xf32>, vector<4x480xf32>, vector<32x480xf32> -> vector<32x480xf32>
    %c0_4 = arith.constant 0 : index
    %c0_5 = arith.constant 0 : index
    %4 = vector.load %arg4[%c0_4, %c0_5] : memref<1x480xf32, #tpu.memory_space<vmem>>, vector<1x480xf32>
    %5 = vector.broadcast %4 : vector<1x480xf32> to vector<32x480xf32>
    %6 = arith.addf %3, %5 : vector<32x480xf32>
    %7 = vector.shape_cast %6 : vector<32x480xf32> to vector<16x2x480xf32>
    %c0_6 = arith.constant 0 : index
    %c0_7 = arith.constant 0 : index
    %c0_8 = arith.constant 0 : index
    %8 = vector.load %arg6[%c0_6, %c0_7, %c0_8] : memref<16x2x480xf32, #tpu.memory_space<vmem>>, vector<16x2x480xf32>
    tpu.vector_store %arg6[%c0_6, %c0_7, %c0_8], %7 {strides = array<i32>} : memref<16x2x480xf32, #tpu.memory_space<vmem>>, vector<16x2x480xf32>,
    %c0_9 = arith.constant 0 : index
    %c0_10 = arith.constant 0 : index
    %9 = vector.load %arg2[%c0_9, %c0_10] : memref<60x240xf32, #tpu.memory_space<vmem>>, vector<60x240xf32>
    %c0_11 = arith.constant 0 : index
    %c0_12 = arith.constant 0 : index
    %10 = vector.load %arg3[%c0_11, %c0_12] : memref<60x240xf32, #tpu.memory_space<vmem>>, vector<60x240xf32>
    %cst_13 = arith.constant 0.000000e+00 : f32
    %11 = vector.broadcast %cst_13 : f32 to vector<2x60xf32>
    %c0_i32 = arith.constant 0 : i32
    %c16_i32 = arith.constant 16 : i32
    %12 = arith.addi %c0_i32, %c16_i32 : i32
    %c1_i32 = arith.constant 1 : i32
    %13:4 = scf.for %arg9 = %c0_i32 to %12 step %c1_i32 iter_args(%arg10 = %11, %arg11 = %11, %arg12 = %11, %arg13 = %11) -> (vector<2x60xf32>, vector<2x60xf32>, vector<2x60xf32>, vector<2x60xf32>)  : i32 {
      %c15_i32 = arith.constant 15 : i32
      %18 = arith.subi %c15_i32, %arg9 : i32
      %19 = arith.index_cast %arg9 : i32 to index
      %c0_26 = arith.constant 0 : index
      %c0_27 = arith.constant 0 : index
      %20 = vector.load %arg6[%19, %c0_26, %c0_27] : memref<16x2x480xf32, #tpu.memory_space<vmem>>, vector<1x2x480xf32>
      %21 = vector.shape_cast %20 : vector<1x2x480xf32> to vector<2x480xf32>
      %22 = vector.extract_strided_slice %21 {offsets = [0, 0], sizes = [2, 240], strides = [1, 1]} : vector<2x480xf32> to vector<2x240xf32>
      %cst_28 = arith.constant dense<0.000000e+00> : vector<2x240xf32>
      %23 = tpu.matmul %arg10, %9, %cst_28 {dimension_numbers = #tpu.dot_dimension_numbers<[1], [0], [0], [1], [0, 0, 1, 1], [], []>} : vector<2x60xf32>, vector<60x240xf32>, vector<2x240xf32> -> vector<2x240xf32>
      %24 = arith.addf %22, %23 : vector<2x240xf32>
      %25 = arith.index_cast %18 : i32 to index
      %c0_29 = arith.constant 0 : index
      %c0_30 = arith.constant 0 : index
      %26 = vector.load %arg6[%25, %c0_29, %c0_30] : memref<16x2x480xf32, #tpu.memory_space<vmem>>, vector<1x2x480xf32>
      %27 = vector.shape_cast %26 : vector<1x2x480xf32> to vector<2x480xf32>
      %28 = vector.extract_strided_slice %27 {offsets = [0, 240], sizes = [2, 240], strides = [1, 1]} : vector<2x480xf32> to vector<2x240xf32>
      %cst_31 = arith.constant dense<0.000000e+00> : vector<2x240xf32>
      %29 = tpu.matmul %arg12, %10, %cst_31 {dimension_numbers = #tpu.dot_dimension_numbers<[1], [0], [0], [1], [0, 0, 1, 1], [], []>} : vector<2x60xf32>, vector<60x240xf32>, vector<2x240xf32> -> vector<2x240xf32>
      %30 = arith.addf %28, %29 : vector<2x240xf32>
      %31 = vector.extract_strided_slice %24 {offsets = [0, 0], sizes = [2, 60], strides = [1, 1]} : vector<2x240xf32> to vector<2x60xf32>
      %32 = arith.negf %31 : vector<2x60xf32>
      %33 = math.exp %32 : vector<2x60xf32>
      %cst_32 = arith.constant 1.000000e+00 : f32
      %34 = vector.broadcast %cst_32 : f32 to vector<2x60xf32>
      %35 = arith.addf %34, %33 : vector<2x60xf32>
      %36 = arith.divf %34, %35 : vector<2x60xf32>
      %37 = vector.extract_strided_slice %24 {offsets = [0, 60], sizes = [2, 60], strides = [1, 1]} : vector<2x240xf32> to vector<2x60xf32>
      %38 = arith.negf %37 : vector<2x60xf32>
      %39 = math.exp %38 : vector<2x60xf32>
      %cst_33 = arith.constant 1.000000e+00 : f32
      %40 = vector.broadcast %cst_33 : f32 to vector<2x60xf32>
      %41 = arith.addf %40, %39 : vector<2x60xf32>
      %42 = arith.divf %40, %41 : vector<2x60xf32>
      %43 = vector.extract_strided_slice %24 {offsets = [0, 120], sizes = [2, 60], strides = [1, 1]} : vector<2x240xf32> to vector<2x60xf32>
      %44 = math.tanh %43 : vector<2x60xf32>
      %45 = vector.extract_strided_slice %24 {offsets = [0, 180], sizes = [2, 60], strides = [1, 1]} : vector<2x240xf32> to vector<2x60xf32>
      %46 = arith.negf %45 : vector<2x60xf32>
      %47 = math.exp %46 : vector<2x60xf32>
      %cst_34 = arith.constant 1.000000e+00 : f32
      %48 = vector.broadcast %cst_34 : f32 to vector<2x60xf32>
      %49 = arith.addf %48, %47 : vector<2x60xf32>
      %50 = arith.divf %48, %49 : vector<2x60xf32>
      %51 = arith.mulf %42, %arg11 : vector<2x60xf32>
      %52 = arith.mulf %36, %44 : vector<2x60xf32>
      %53 = arith.addf %51, %52 : vector<2x60xf32>
      %54 = math.tanh %53 : vector<2x60xf32>
      %55 = arith.mulf %50, %54 : vector<2x60xf32>
      %56 = vector.extract_strided_slice %30 {offsets = [0, 0], sizes = [2, 60], strides = [1, 1]} : vector<2x240xf32> to vector<2x60xf32>
      %57 = arith.negf %56 : vector<2x60xf32>
      %58 = math.exp %57 : vector<2x60xf32>
      %cst_35 = arith.constant 1.000000e+00 : f32
      %59 = vector.broadcast %cst_35 : f32 to vector<2x60xf32>
      %60 = arith.addf %59, %58 : vector<2x60xf32>
      %61 = arith.divf %59, %60 : vector<2x60xf32>
      %62 = vector.extract_strided_slice %30 {offsets = [0, 60], sizes = [2, 60], strides = [1, 1]} : vector<2x240xf32> to vector<2x60xf32>
      %63 = arith.negf %62 : vector<2x60xf32>
      %64 = math.exp %63 : vector<2x60xf32>
      %cst_36 = arith.constant 1.000000e+00 : f32
      %65 = vector.broadcast %cst_36 : f32 to vector<2x60xf32>
      %66 = arith.addf %65, %64 : vector<2x60xf32>
      %67 = arith.divf %65, %66 : vector<2x60xf32>
      %68 = vector.extract_strided_slice %30 {offsets = [0, 120], sizes = [2, 60], strides = [1, 1]} : vector<2x240xf32> to vector<2x60xf32>
      %69 = math.tanh %68 : vector<2x60xf32>
      %70 = vector.extract_strided_slice %30 {offsets = [0, 180], sizes = [2, 60], strides = [1, 1]} : vector<2x240xf32> to vector<2x60xf32>
      %71 = arith.negf %70 : vector<2x60xf32>
      %72 = math.exp %71 : vector<2x60xf32>
      %cst_37 = arith.constant 1.000000e+00 : f32
      %73 = vector.broadcast %cst_37 : f32 to vector<2x60xf32>
      %74 = arith.addf %73, %72 : vector<2x60xf32>
      %75 = arith.divf %73, %74 : vector<2x60xf32>
      %76 = arith.mulf %67, %arg13 : vector<2x60xf32>
      %77 = arith.mulf %61, %69 : vector<2x60xf32>
      %78 = arith.addf %76, %77 : vector<2x60xf32>
      %79 = math.tanh %78 : vector<2x60xf32>
      %80 = arith.mulf %75, %79 : vector<2x60xf32>
      %81 = arith.index_cast %arg9 : i32 to index
      %c0_38 = arith.constant 0 : index
      %c0_39 = arith.constant 0 : index
      %82 = vector.load %arg7[%81, %c0_38, %c0_39] : memref<16x2x60xf32, #tpu.memory_space<vmem>>, vector<1x2x60xf32>
      %83 = vector.shape_cast %82 : vector<1x2x60xf32> to vector<2x60xf32>
      %84 = vector.shape_cast %55 : vector<2x60xf32> to vector<1x2x60xf32>
      tpu.vector_store %arg7[%81, %c0_38, %c0_39], %84 {strides = array<i32>} : memref<16x2x60xf32, #tpu.memory_space<vmem>>, vector<1x2x60xf32>,
      %85 = arith.index_cast %18 : i32 to index
      %c0_40 = arith.constant 0 : index
      %c0_41 = arith.constant 0 : index
      %86 = vector.load %arg8[%85, %c0_40, %c0_41] : memref<16x2x60xf32, #tpu.memory_space<vmem>>, vector<1x2x60xf32>
      %87 = vector.shape_cast %86 : vector<1x2x60xf32> to vector<2x60xf32>
      %88 = vector.shape_cast %80 : vector<2x60xf32> to vector<1x2x60xf32>
      tpu.vector_store %arg8[%85, %c0_40, %c0_41], %88 {strides = array<i32>} : memref<16x2x60xf32, #tpu.memory_space<vmem>>, vector<1x2x60xf32>,
      scf.yield %55, %53, %80, %78 : vector<2x60xf32>, vector<2x60xf32>, vector<2x60xf32>, vector<2x60xf32>
    }
    %c16_i32_14 = arith.constant 16 : i32
    %c0_15 = arith.constant 0 : index
    %c0_16 = arith.constant 0 : index
    %c0_17 = arith.constant 0 : index
    %14 = vector.load %arg7[%c0_15, %c0_16, %c0_17] : memref<16x2x60xf32, #tpu.memory_space<vmem>>, vector<16x2x60xf32>
    %c0_18 = arith.constant 0 : index
    %c0_19 = arith.constant 0 : index
    %c0_20 = arith.constant 0 : index
    %15 = vector.load %arg5[%c0_18, %c0_19, %c0_20] : memref<16x2x120xf32, #tpu.memory_space<vmem>>, vector<16x2x60xf32>
    tpu.vector_store %arg5[%c0_18, %c0_19, %c0_20], %14 {strides = array<i32>} : memref<16x2x120xf32, #tpu.memory_space<vmem>>, vector<16x2x60xf32>,
    %c0_21 = arith.constant 0 : index
    %c0_22 = arith.constant 0 : index
    %c0_23 = arith.constant 0 : index
    %16 = vector.load %arg8[%c0_21, %c0_22, %c0_23] : memref<16x2x60xf32, #tpu.memory_space<vmem>>, vector<16x2x60xf32>
    %c0_24 = arith.constant 0 : index
    %c0_25 = arith.constant 0 : index
    %c60 = arith.constant 60 : index
    %17 = vector.load %arg5[%c0_24, %c0_25, %c60] : memref<16x2x120xf32, #tpu.memory_space<vmem>>, vector<16x2x60xf32>
    tpu.vector_store %arg5[%c0_24, %c0_25, %c60], %16 {strides = array<i32>} : memref<16x2x120xf32, #tpu.memory_space<vmem>>, vector<16x2x60xf32>,
    return
  }
}

module attributes {stable_mosaic.version = 11 : i64} {
  func.func @_head_kernel(%arg0: i32, %arg1: memref<16x2x120xf32, #tpu.memory_space<vmem>>, %arg2: memref<120x100xf32, #tpu.memory_space<vmem>>, %arg3: memref<1x100xf32, #tpu.memory_space<vmem>>, %arg4: memref<100x5xf32, #tpu.memory_space<vmem>>, %arg5: memref<1x5xf32, #tpu.memory_space<vmem>>, %arg6: memref<16x2x5xf32, #tpu.memory_space<vmem>>) attributes {dimension_semantics = [#tpu.dimension_semantics<parallel>], iteration_bounds = array<i64: 1>, scalar_prefetch = 0 : i64, scratch_operands = 0 : i64, tpu.core_type = #tpu.core_type<tc>, window_params = [{transform_indices = @transform_0, window_bounds = array<i64: 16, 2, 120>}, {pipeline_mode = #tpu.pipeline_mode<synchronous>, transform_indices = @transform_1, window_bounds = array<i64: 120, 100>}, {pipeline_mode = #tpu.pipeline_mode<synchronous>, transform_indices = @transform_2, window_bounds = array<i64: 1, 100>}, {pipeline_mode = #tpu.pipeline_mode<synchronous>, transform_indices = @transform_3, window_bounds = array<i64: 100, 5>}, {pipeline_mode = #tpu.pipeline_mode<synchronous>, transform_indices = @transform_4, window_bounds = array<i64: 1, 5>}, {transform_indices = @transform_5, window_bounds = array<i64: 16, 2, 5>}]} {
    %c0 = arith.constant 0 : index
    %c0_0 = arith.constant 0 : index
    %c0_1 = arith.constant 0 : index
    %0 = vector.load %arg1[%c0, %c0_0, %c0_1] : memref<16x2x120xf32, #tpu.memory_space<vmem>>, vector<16x2x120xf32>
    %1 = vector.shape_cast %0 : vector<16x2x120xf32> to vector<32x120xf32>
    %c0_2 = arith.constant 0 : index
    %c0_3 = arith.constant 0 : index
    %2 = vector.load %arg2[%c0_2, %c0_3] : memref<120x100xf32, #tpu.memory_space<vmem>>, vector<120x100xf32>
    %cst = arith.constant dense<0.000000e+00> : vector<32x100xf32>
    %3 = tpu.matmul %1, %2, %cst {dimension_numbers = #tpu.dot_dimension_numbers<[1], [0], [0], [1], [0, 0, 1, 1], [], []>} : vector<32x120xf32>, vector<120x100xf32>, vector<32x100xf32> -> vector<32x100xf32>
    %c0_4 = arith.constant 0 : index
    %c0_5 = arith.constant 0 : index
    %4 = vector.load %arg3[%c0_4, %c0_5] : memref<1x100xf32, #tpu.memory_space<vmem>>, vector<1x100xf32>
    %5 = vector.broadcast %4 : vector<1x100xf32> to vector<32x100xf32>
    %6 = arith.addf %3, %5 : vector<32x100xf32>
    %c0_6 = arith.constant 0 : index
    %c0_7 = arith.constant 0 : index
    %7 = vector.load %arg4[%c0_6, %c0_7] : memref<100x5xf32, #tpu.memory_space<vmem>>, vector<100x5xf32>
    %cst_8 = arith.constant dense<0.000000e+00> : vector<32x5xf32>
    %8 = tpu.matmul %6, %7, %cst_8 {dimension_numbers = #tpu.dot_dimension_numbers<[1], [0], [0], [1], [0, 0, 1, 1], [], []>} : vector<32x100xf32>, vector<100x5xf32>, vector<32x5xf32> -> vector<32x5xf32>
    %c0_9 = arith.constant 0 : index
    %c0_10 = arith.constant 0 : index
    %9 = vector.load %arg5[%c0_9, %c0_10] : memref<1x5xf32, #tpu.memory_space<vmem>>, vector<1x5xf32>
    %10 = vector.broadcast %9 : vector<1x5xf32> to vector<32x5xf32>
    %11 = arith.addf %8, %10 : vector<32x5xf32>
    %cst_11 = arith.constant dense<0xFF800000> : vector<32xf32>
    %12 = vector.multi_reduction <maximumf>, %11, %cst_11 [1] : vector<32x5xf32> to vector<32xf32>
    %13 = vector.shape_cast %12 : vector<32xf32> to vector<32x1xf32>
    %14 = vector.broadcast %13 : vector<32x1xf32> to vector<32x5xf32>
    %15 = arith.subf %11, %14 : vector<32x5xf32>
    %16 = math.exp %15 : vector<32x5xf32>
    %cst_12 = arith.constant dense<0.000000e+00> : vector<32xf32>
    %17 = vector.multi_reduction <add>, %16, %cst_12 [1] : vector<32x5xf32> to vector<32xf32>
    %18 = vector.shape_cast %17 : vector<32xf32> to vector<32x1xf32>
    %19 = vector.broadcast %18 : vector<32x1xf32> to vector<32x5xf32>
    %20 = arith.divf %16, %19 : vector<32x5xf32>
    %21 = vector.shape_cast %20 : vector<32x5xf32> to vector<16x2x5xf32>
    %c0_13 = arith.constant 0 : index
    %c0_14 = arith.constant 0 : index
    %c0_15 = arith.constant 0 : index
    %22 = vector.load %arg6[%c0_13, %c0_14, %c0_15] : memref<16x2x5xf32, #tpu.memory_space<vmem>>, vector<16x2x5xf32>
    tpu.vector_store %arg6[%c0_13, %c0_14, %c0_15], %21 {strides = array<i32>} : memref<16x2x5xf32, #tpu.memory_space<vmem>>, vector<16x2x5xf32>,
    return
  }
  func.func @transform_0(%arg0: i32) -> (i32, i32, i32) {
    %c0_i32 = arith.constant 0 : i32
    %c0_i32_0 = arith.constant 0 : i32
    %c0_i32_1 = arith.constant 0 : i32
    return %arg0, %c0_i32, %c0_i32_0 : i32, i32, i32
  }
  func.func @transform_1(%arg0: i32) -> (i32, i32) {
    %c0_i32 = arith.constant 0 : i32
    %c0_i32_0 = arith.constant 0 : i32
    %c0_i32_1 = arith.constant 0 : i32
    return %c0_i32, %c0_i32_0 : i32, i32
  }
  func.func @transform_2(%arg0: i32) -> (i32, i32) {
    %c0_i32 = arith.constant 0 : i32
    %c0_i32_0 = arith.constant 0 : i32
    %c0_i32_1 = arith.constant 0 : i32
    return %c0_i32, %c0_i32_0 : i32, i32
  }
  func.func @transform_3(%arg0: i32) -> (i32, i32) {
    %c0_i32 = arith.constant 0 : i32
    %c0_i32_0 = arith.constant 0 : i32
    %c0_i32_1 = arith.constant 0 : i32
    return %c0_i32, %c0_i32_0 : i32, i32
  }
  func.func @transform_4(%arg0: i32) -> (i32, i32) {
    %c0_i32 = arith.constant 0 : i32
    %c0_i32_0 = arith.constant 0 : i32
    %c0_i32_1 = arith.constant 0 : i32
    return %c0_i32, %c0_i32_0 : i32, i32
  }
  func.func @transform_5(%arg0: i32) -> (i32, i32, i32) {
    %c0_i32 = arith.constant 0 : i32
    %c0_i32_0 = arith.constant 0 : i32
    %c0_i32_1 = arith.constant 0 : i32
    return %arg0, %c0_i32, %c0_i32_0 : i32, i32, i32
  }
}

</mosaic_0001>

<llo_original>
// kernel: fel_bilstm_forward.5
$region0: #{fel_bilstm_forward.5}
  #allocation0 [shape = 'u32[]', space=smem, size = 0x4, offset = 0x4, fixed_abs, tag = 'smem constant byte address 0x4 - core index']
  #allocation1 [shape = 'u32[144,128]{1,0:T(1,128)}', space=vmem, size = 0x12000, scoped, tag = 'internal scratch']
  %s0 = inlined_call_operand.vmem [shape: f32[16,2,120], index: 0, kind: input, shape index: {}]
  %s1 = inlined_call_operand.vmem [shape: f32[120,100], index: 1, kind: input, shape index: {}]
  %s2 = inlined_call_operand.vmem [shape: f32[1,100], index: 2, kind: input, shape index: {}]
  %s3 = inlined_call_operand.vmem [shape: f32[100,5], index: 3, kind: input, shape index: {}]
  %s4 = inlined_call_operand.vmem [shape: f32[1,5], index: 4, kind: input, shape index: {}]
  %s5 = inlined_call_operand.vmem [shape: f32[16,2,5], index: 5, kind: output, shape index: {}]
  %s6 = sld [smem:[#allocation0]]
  $region30: #{fel_bilstm_forward.5} parent=0
    _
  %s8 = ssub.s32 1, %s6
  %s9 = scalar_select 0, %s8, %s6
  // Predicated region
  $region2: #{fel_bilstm_forward.5} parent=0 // pred_check
    _
  $region3: #{fel_bilstm_forward.5} parent=0 // pred_check_branch
    %11 = sbr.rel (0) target = $region5
  $region4: #{fel_bilstm_forward.5} parent=0 // pred_region
    _
  $region5: #{fel_bilstm_forward.5} parent=0 // pred_fallthru
    _
  // Predicated region
  $region6: #{fel_bilstm_forward.5} parent=0 // pred_check
    _
  $region7: #{fel_bilstm_forward.5} parent=0 // pred_check_branch
    %13 = sbr.rel (0) target = $region9
  $region8: #{fel_bilstm_forward.5} parent=0 // pred_region
    _
  $region9: #{fel_bilstm_forward.5} parent=0 // pred_fallthru
    _
  // Predicated region
  $region10: #{fel_bilstm_forward.5} parent=0 // pred_check
    _
  $region11: #{fel_bilstm_forward.5} parent=0 // pred_check_branch
    %15 = sbr.rel (0) target = $region13
  $region12: #{fel_bilstm_forward.5} parent=0 // pred_region
    _
  $region13: #{fel_bilstm_forward.5} parent=0 // pred_fallthru
    _
  // Predicated region
  $region14: #{fel_bilstm_forward.5} parent=0 // pred_check
    _
  $region15: #{fel_bilstm_forward.5} parent=0 // pred_check_branch
    %17 = sbr.rel (0) target = $region17
  $region16: #{fel_bilstm_forward.5} parent=0 // pred_region
    _
  $region17: #{fel_bilstm_forward.5} parent=0 // pred_fallthru
    _
  // Predicated region
  $region18: #{fel_bilstm_forward.5} parent=0 // pred_check
    _
  $region19: #{fel_bilstm_forward.5} parent=0 // pred_check_branch
    %19 = sbr.rel (0) target = $region21
  $region20: #{fel_bilstm_forward.5} parent=0 // pred_region
    _
  $region21: #{fel_bilstm_forward.5} parent=0 // pred_fallthru
    _
  %v20 = vld [vmem:[%s0] sm:$0x3]
  %v21 = vld [vmem:[%s0 + $0x2] sm:$0x3]
  %v22 = vld [vmem:[%s0 + $0x4] sm:$0x3]
  %v23 = vld [vmem:[%s0 + $0x6] sm:$0x3]
  %v24 = vld [vmem:[%s0 + $0x8] sm:$0x3]
  %v25 = vld [vmem:[%s0 + $0xa] sm:$0x3]
  %v26 = vld [vmem:[%s0 + $0xc] sm:$0x3]
  %v27 = vld [vmem:[%s0 + $0xe] sm:$0x3]
  %v28 = vld [vmem:[%s0 + $0x10] sm:$0x3]
  %v29 = vld [vmem:[%s0 + $0x12] sm:$0x3]
  %v30 = vld [vmem:[%s0 + $0x14] sm:$0x3]
  %v31 = vld [vmem:[%s0 + $0x16] sm:$0x3]
  %v32 = vld [vmem:[%s0 + $0x18] sm:$0x3]
  %v33 = vld [vmem:[%s0 + $0x1a] sm:$0x3]
  %v34 = vld [vmem:[%s0 + $0x1c] sm:$0x3]
  %v35 = vld [vmem:[%s0 + $0x1e] sm:$0x3]
  %v36 = vld [vmem:[%s1] sm:$0xff]
  %v37 = vld [vmem:[%s1 + $0x8] sm:$0xff]
  %v38 = vld [vmem:[%s1 + $0x10] sm:$0xff]
  %v39 = vld [vmem:[%s1 + $0x18] sm:$0xff]
  %v40 = vld [vmem:[%s1 + $0x20] sm:$0xff]
  %v41 = vld [vmem:[%s1 + $0x28] sm:$0xff]
  %v42 = vld [vmem:[%s1 + $0x30] sm:$0xff]
  %v43 = vld [vmem:[%s1 + $0x38] sm:$0xff]
  %v44 = vld [vmem:[%s1 + $0x40] sm:$0xff]
  %v45 = vld [vmem:[%s1 + $0x48] sm:$0xff]
  %v46 = vld [vmem:[%s1 + $0x50] sm:$0xff]
  %v47 = vld [vmem:[%s1 + $0x58] sm:$0xff]
  %v48 = vld [vmem:[%s1 + $0x60] sm:$0xff]
  %v49 = vld [vmem:[%s1 + $0x68] sm:$0xff]
  %v50 = vld [vmem:[%s1 + $0x70] sm:$0xff]
  %v51 = vld [vmem:[%s2] sm:$0x1]
  %v53 = vlaneseq
  %v54 = vshrl.u32 %v53, 7
  %v55 = vsub.s32 0, %v54
  %v56 = vrot.slane %v51, %v55
  %v74 = vcombine.low %v20, %v21
  %v75 = vcombine.low %v22, %v23
  %v77 = vunpack.c.l.s4 1983009808
  %v78 = vunpack.c.0.s8 %v77
  %v79 = vlaneseq
  %v80 = vshrl.u32 %v79, 7
  %v81 = vsub.s32 %v78, %v80
  %v82 = vrot.slane %v74, %v81
  %v84 = vunpack.c.l.s4 1983009808
  %v85 = vunpack.c.0.s8 %v84
  %v86 = vlaneseq
  %v87 = vshrl.u32 %v86, 7
  %v88 = vsub.s32 %v85, %v87
  %v89 = vrot.slane %v75, %v88
  %v90 = vcombine.low %v82, %v89
  %v91 = vcombine.low %v24, %v25
  %v92 = vcombine.low %v26, %v27
  %v94 = vunpack.c.l.s4 1983009808
  %v95 = vunpack.c.0.s8 %v94
  %v96 = vlaneseq
  %v97 = vshrl.u32 %v96, 7
  %v98 = vsub.s32 %v95, %v97
  %v99 = vrot.slane %v91, %v98
  %v101 = vunpack.c.l.s4 1983009808
  %v102 = vunpack.c.0.s8 %v101
  %v103 = vlaneseq
  %v104 = vshrl.u32 %v103, 7
  %v105 = vsub.s32 %v102, %v104
  %v106 = vrot.slane %v92, %v105
  %v107 = vcombine.low %v99, %v106
  %v108 = vcombine.low %v28, %v29
  %v109 = vcombine.low %v30, %v31
  %v111 = vunpack.c.l.s4 1983009808
  %v112 = vunpack.c.0.s8 %v111
  %v113 = vlaneseq
  %v114 = vshrl.u32 %v113, 7
  %v115 = vsub.s32 %v112, %v114
  %v116 = vrot.slane %v108, %v115
  %v118 = vunpack.c.l.s4 1983009808
  %v119 = vunpack.c.0.s8 %v118
  %v120 = vlaneseq
  %v121 = vshrl.u32 %v120, 7
  %v122 = vsub.s32 %v119, %v121
  %v123 = vrot.slane %v109, %v122
  %v124 = vcombine.low %v116, %v123
  %v125 = vcombine.low %v32, %v33
  %v126 = vcombine.low %v34, %v35
  %v128 = vunpack.c.l.s4 1983009808
  %v129 = vunpack.c.0.s8 %v128
  %v130 = vlaneseq
  %v131 = vshrl.u32 %v130, 7
  %v132 = vsub.s32 %v129, %v131
  %v133 = vrot.slane %v125, %v132
  %v135 = vunpack.c.l.s4 1983009808
  %v136 = vunpack.c.0.s8 %v135
  %v137 = vlaneseq
  %v138 = vshrl.u32 %v137, 7
  %v139 = vsub.s32 %v136, %v138
  %v140 = vrot.slane %v126, %v139
  %v141 = vcombine.low %v133, %v140
  %vm142 = vcmask 982016
  %v143 = vsel %vm142, %v90, 0
  %v145 = vsel %vm142, %v107, 0
  %v147 = vsel %vm142, %v124, 0
  %v149 = vsel %vm142, %v141, 0
  %151 = vmatprep.subr.mxu0 0.0
  %152 = vmatpush1.msra.mxu0 %v36
  %153 = vmatprep.subr.mxu0 0.0
  %154 = vmatpush1.msra.mxu0 %v37
  %155 = vmatprep.subr.mxu0 0.0
  %156 = vmatpush1.msra.mxu0 %v38
  %157 = vmatprep.subr.mxu0 0.0
  %158 = vmatpush1.msra.mxu0 %v39
  %159 = vmatprep.subr.mxu0 0.0
  %160 = vmatpush1.msra.mxu0 %v40
  %161 = vmatprep.subr.mxu0 0.0
  %162 = vmatpush1.msra.mxu0 %v41
  %163 = vmatprep.subr.mxu0 0.0
  %164 = vmatpush1.msra.mxu0 %v42
  %165 = vmatprep.subr.mxu0 0.0
  %166 = vmatpush1.msra.mxu0 %v43
  %167 = vmatprep.subr.mxu0 0.0
  %168 = vmatpush1.msra.mxu0 %v44
  %169 = vmatprep.subr.mxu0 0.0
  %170 = vmatpush1.msra.mxu0 %v45
  %171 = vmatprep.subr.mxu0 0.0
  %172 = vmatpush1.msra.mxu0 %v46
  %173 = vmatprep.subr.mxu0 0.0
  %174 = vmatpush1.msra.mxu0 %v47
  %175 = vmatprep.subr.mxu0 0.0
  %176 = vmatpush1.msra.mxu0 %v48
  %177 = vmatprep.subr.mxu0 0.0
  %178 = vmatpush1.msra.mxu0 %v49
  %179 = vmatprep.subr.mxu0 0.0
  %180 = vmatpush1.msra.mxu0 %v50
  %181 = vmatprep.subr.mxu0 0.0
  %182 = vmatpush1.msra.mxu0 0.0
  %183 = vmatprep.subr.mxu0 0.0
  %184 = vmatpush1.msra.mxu0 0.0
  %185 = vmatprep.subr.mxu0 0.0
  %186 = vmatpush1.msra.mxu0 0.0
  %187 = vmatprep.subr.mxu0 0.0
  %188 = vmatpush1.msra.mxu0 0.0
  %189 = vmatprep.subr.mxu0 0.0
  %190 = vmatpush1.msra.mxu0 0.0
  %191 = vmatprep.subr.mxu0 0.0
  %192 = vmatpush1.msra.mxu0 0.0
  %193 = vmatprep.subr.mxu0 0.0
  %194 = vmatpush1.msra.mxu0 0.0
  %195 = vmatprep.subr.mxu0 0.0
  %196 = vmatpush1.msra.mxu0 0.0
  %197 = vmatprep.subr.mxu0 0.0
  %198 = vmatpush1.msra.mxu0 0.0
  %199 = vmatprep.subr.mxu0 0.0
  %200 = vmatpush1.msra.mxu0 0.0
  %201 = vmatprep.subr.mxu0 0.0
  %202 = vmatpush1.msra.mxu0 0.0
  %203 = vmatprep.subr.mxu0 0.0
  %204 = vmatpush1.msra.mxu0 0.0
  %205 = vmatprep.subr.mxu0 0.0
  %206 = vmatpush1.msra.mxu0 0.0
  %207 = vmatprep.subr.mxu0 0.0
  %208 = vmatpush1.msra.mxu0 0.0
  %209 = vmatprep.subr.mxu0 0.0
  %210 = vmatpush1.msra.mxu0 0.0
  %211 = vmatprep.subr.mxu0 0.0
  %212 = vmatpush1.msra.mxu0 0.0
  %213 = vmatprep.subr.mxu0 0.0
  %214 = vmatpush1.msra.mxu0 0.0
  %215 = vmatprep.mubr.f32.mxu0 0.0
  %216 = vmatmul.mubr.f32.gmra.mrb[0].mxu0 %v143
  %v217 = vpop.f32.mrb[0].mxu0
  %v218 = vadd.f32 %v56, %v217
  %v219 = vpop.f32.mrb[0].mxu0
  %220 = vmatprep.mubr.f32.mxu0 0.0
  %221 = vmatmul.mubr.f32.gmra.mrb[0].mxu0 %v145
  %v222 = vpop.f32.mrb[0].mxu0
  %v223 = vadd.f32 %v56, %v222
  %v224 = vpop.f32.mrb[0].mxu0
  %225 = vmatprep.mubr.f32.mxu0 0.0
  %226 = vmatmul.mubr.f32.gmra.mrb[0].mxu0 %v147
  %v227 = vpop.f32.mrb[0].mxu0
  %v228 = vadd.f32 %v56, %v227
  %v229 = vpop.f32.mrb[0].mxu0
  %230 = vmatprep.mubr.f32.mxu0 0.0
  %231 = vmatmul.mubr.f32.gmra.mrb[0].mxu0 %v149
  %v232 = vpop.f32.mrb[0].mxu0
  %v233 = vadd.f32 %v56, %v232
  %v234 = vpop.f32.mrb[0].mxu0
  %235 = vdwg.mxu0
  %v236 = vld [vmem:[%s3] sm:$0xff]
  %v237 = vld [vmem:[%s3 + $0x8] sm:$0xff]
  %v238 = vld [vmem:[%s3 + $0x10] sm:$0xff]
  %v239 = vld [vmem:[%s3 + $0x18] sm:$0xff]
  %v240 = vld [vmem:[%s3 + $0x20] sm:$0xff]
  %v241 = vld [vmem:[%s3 + $0x28] sm:$0xff]
  %v242 = vld [vmem:[%s3 + $0x30] sm:$0xff]
  %v243 = vld [vmem:[%s3 + $0x38] sm:$0xff]
  %v244 = vld [vmem:[%s3 + $0x40] sm:$0xff]
  %v245 = vld [vmem:[%s3 + $0x48] sm:$0xff]
  %v246 = vld [vmem:[%s3 + $0x50] sm:$0xff]
  %v247 = vld [vmem:[%s3 + $0x58] sm:$0xff]
  %v248 = vld [vmem:[%s3 + $0x60] sm:$0xf]
  %v249 = vld [vmem:[%s4] sm:$0x1]
  %v251 = vlaneseq
  %v252 = vshrl.u32 %v251, 7
  %v253 = vsub.s32 0, %v252
  %v254 = vrot.slane %v249, %v253
  %vm256 = vcmask 818176
  %v258 = vsel %vm256, %v218, 0
  %v261 = vsel %vm256, %v223, 0
  %v264 = vsel %vm256, %v228, 0
  %v267 = vsel %vm256, %v233, 0
  %vm269 = vcmask 1043456
  %v271 = vsel %vm269, %v248, 0
  %273 = vmatprep.subr.mxu0 0.0
  %274 = vmatpush1.msra.mxu0 %v236
  %275 = vmatprep.subr.mxu0 0.0
  %276 = vmatpush1.msra.mxu0 %v237
  %277 = vmatprep.subr.mxu0 0.0
  %278 = vmatpush1.msra.mxu0 %v238
  %279 = vmatprep.subr.mxu0 0.0
  %280 = vmatpush1.msra.mxu0 %v239
  %281 = vmatprep.subr.mxu0 0.0
  %282 = vmatpush1.msra.mxu0 %v240
  %283 = vmatprep.subr.mxu0 0.0
  %284 = vmatpush1.msra.mxu0 %v241
  %285 = vmatprep.subr.mxu0 0.0
  %286 = vmatpush1.msra.mxu0 %v242
  %287 = vmatprep.subr.mxu0 0.0
  %288 = vmatpush1.msra.mxu0 %v243
  %289 = vmatprep.subr.mxu0 0.0
  %290 = vmatpush1.msra.mxu0 %v244
  %291 = vmatprep.subr.mxu0 0.0
  %292 = vmatpush1.msra.mxu0 %v245
  %293 = vmatprep.subr.mxu0 0.0
  %294 = vmatpush1.msra.mxu0 %v246
  %295 = vmatprep.subr.mxu0 0.0
  %296 = vmatpush1.msra.mxu0 %v247
  %297 = vmatprep.subr.mxu0 0.0
  %298 = vmatpush1.msra.mxu0 %v271
  %299 = vmatprep.subr.mxu0 0.0
  %300 = vmatpush1.msra.mxu0 0.0
  %301 = vmatprep.subr.mxu0 0.0
  %302 = vmatpush1.msra.mxu0 0.0
  %303 = vmatprep.subr.mxu0 0.0
  %304 = vmatpush1.msra.mxu0 0.0
  %305 = vmatprep.subr.mxu0 0.0
  %306 = vmatpush1.msra.mxu0 0.0
  %307 = vmatprep.subr.mxu0 0.0
  %308 = vmatpush1.msra.mxu0 0.0
  %309 = vmatprep.subr.mxu0 0.0
  %310 = vmatpush1.msra.mxu0 0.0
  %311 = vmatprep.subr.mxu0 0.0
  %312 = vmatpush1.msra.mxu0 0.0
  %313 = vmatprep.subr.mxu0 0.0
  %314 = vmatpush1.msra.mxu0 0.0
  %315 = vmatprep.subr.mxu0 0.0
  %316 = vmatpush1.msra.mxu0 0.0
  %317 = vmatprep.subr.mxu0 0.0
  %318 = vmatpush1.msra.mxu0 0.0
  %319 = vmatprep.subr.mxu0 0.0
  %320 = vmatpush1.msra.mxu0 0.0
  %321 = vmatprep.subr.mxu0 0.0
  %322 = vmatpush1.msra.mxu0 0.0
  %323 = vmatprep.subr.mxu0 0.0
  %324 = vmatpush1.msra.mxu0 0.0
  %325 = vmatprep.subr.mxu0 0.0
  %326 = vmatpush1.msra.mxu0 0.0
  %327 = vmatprep.subr.mxu0 0.0
  %328 = vmatpush1.msra.mxu0 0.0
  %329 = vmatprep.subr.mxu0 0.0
  %330 = vmatpush1.msra.mxu0 0.0
  %331 = vmatprep.subr.mxu0 0.0
  %332 = vmatpush1.msra.mxu0 0.0
  %333 = vmatprep.subr.mxu0 0.0
  %334 = vmatpush1.msra.mxu0 0.0
  %335 = vmatprep.subr.mxu0 0.0
  %336 = vmatpush1.msra.mxu0 0.0
  %337 = vmatprep.mubr.f32.mxu0 0.0
  %338 = vmatmul.mubr.f32.gmra.mrb[0].mxu0 %v258
  %v339 = vpop.f32.mrb[0].mxu0
  %v340 = vadd.f32 %v254, %v339
  %v341 = vpop.f32.mrb[0].mxu0
  %342 = vmatprep.mubr.f32.mxu0 0.0
  %343 = vmatmul.mubr.f32.gmra.mrb[0].mxu0 %v261
  %v344 = vpop.f32.mrb[0].mxu0
  %v345 = vadd.f32 %v254, %v344
  %v346 = vpop.f32.mrb[0].mxu0
  %347 = vmatprep.mubr.f32.mxu0 0.0
  %348 = vmatmul.mubr.f32.gmra.mrb[0].mxu0 %v264
  %v349 = vpop.f32.mrb[0].mxu0
  %v350 = vadd.f32 %v254, %v349
  %v351 = vpop.f32.mrb[0].mxu0
  %352 = vmatprep.mubr.f32.mxu0 0.0
  %353 = vmatmul.mubr.f32.gmra.mrb[0].mxu0 %v267
  %v354 = vpop.f32.mrb[0].mxu0
  %v355 = vadd.f32 %v254, %v354
  %v356 = vpop.f32.mrb[0].mxu0
  %357 = vdwg.mxu0
  %vm358 = vcmask 39936
  %v359 = vsel %vm358, %v340, -inf
  %360 = vmax.xlane.f32.xlu0 %v359
  %v361 = vpop.xlane.xlu0 %360
  %v362 = vsel %vm358, %v345, -inf
  %363 = vmax.xlane.f32.xlu0 %v362
  %v364 = vpop.xlane.xlu0 %363
  %v365 = vsel %vm358, %v350, -inf
  %366 = vmax.xlane.f32.xlu0 %v365
  %v367 = vpop.xlane.xlu0 %366
  %v368 = vsel %vm358, %v355, -inf
  %369 = vmax.xlane.f32.xlu0 %v368
  %v370 = vpop.xlane.xlu0 %369
  %v371 = vsub.f32 %v340, %v361
  %v372 = vsub.f32 %v345, %v364
  %v373 = vsub.f32 %v350, %v367
  %v374 = vsub.f32 %v355, %v370
  %v375 = vmul.f32 %v371, 1.442695
  %v376 = vpow.pop %v375
  %v377 = vmul.f32 %v372, 1.442695
  %v378 = vpow.pop %v377
  %v379 = vmul.f32 %v373, 1.442695
  %v380 = vpow.pop %v379
  %v381 = vmul.f32 %v374, 1.442695
  %v382 = vpow.pop %v381
  %v383 = vsel %vm358, %v376, 0.0
  %384 = vadd.xlane.f32.xlu0 %v383
  %v385 = vpop.xlane.xlu0 %384
  %v386 = vsel %vm358, %v378, 0.0
  %387 = vadd.xlane.f32.xlu0 %v386
  %v388 = vpop.xlane.xlu0 %387
  %v389 = vsel %vm358, %v380, 0.0
  %390 = vadd.xlane.f32.xlu0 %v389
  %v391 = vpop.xlane.xlu0 %390
  %v392 = vsel %vm358, %v382, 0.0
  %393 = vadd.xlane.f32.xlu0 %v392
  %v394 = vpop.xlane.xlu0 %393
  %v395 = vrcp.pop %v385
  %v396 = vmul.f32 %v376, %v395
  %v397 = vrcp.pop %v388
  %v398 = vmul.f32 %v378, %v397
  %v399 = vrcp.pop %v391
  %v400 = vmul.f32 %v380, %v399
  %v401 = vrcp.pop %v394
  %v402 = vmul.f32 %v382, %v401
  %v407 = vcombine.high %v396, %v396
  %v409 = vunpack.c.l.s4 1983009808
  %v410 = vunpack.c.0.s8 %v409
  %v411 = vlaneseq
  %v412 = vshrl.u32 %v411, 7
  %v413 = vsub.s32 %v410, %v412
  %v414 = vrot.slane %v396, %v413
  %v416 = vunpack.c.l.s4 1983009808
  %v417 = vunpack.c.0.s8 %v416
  %v418 = vlaneseq
  %v419 = vshrl.u32 %v418, 7
  %v420 = vsub.s32 %v417, %v419
  %v421 = vrot.slane %v407, %v420
  %v422 = vcombine.high %v414, %v414
  %v423 = vcombine.high %v421, %v421
  %v424 = vcombine.high %v398, %v398
  %v426 = vunpack.c.l.s4 1983009808
  %v427 = vunpack.c.0.s8 %v426
  %v428 = vlaneseq
  %v429 = vshrl.u32 %v428, 7
  %v430 = vsub.s32 %v427, %v429
  %v431 = vrot.slane %v398, %v430
  %v433 = vunpack.c.l.s4 1983009808
  %v434 = vunpack.c.0.s8 %v433
  %v435 = vlaneseq
  %v436 = vshrl.u32 %v435, 7
  %v437 = vsub.s32 %v434, %v436
  %v438 = vrot.slane %v424, %v437
  %v439 = vcombine.high %v431, %v431
  %v440 = vcombine.high %v438, %v438
  %v441 = vcombine.high %v400, %v400
  %v443 = vunpack.c.l.s4 1983009808
  %v444 = vunpack.c.0.s8 %v443
  %v445 = vlaneseq
  %v446 = vshrl.u32 %v445, 7
  %v447 = vsub.s32 %v444, %v446
  %v448 = vrot.slane %v400, %v447
  %v450 = vunpack.c.l.s4 1983009808
  %v451 = vunpack.c.0.s8 %v450
  %v452 = vlaneseq
  %v453 = vshrl.u32 %v452, 7
  %v454 = vsub.s32 %v451, %v453
  %v455 = vrot.slane %v441, %v454
  %v456 = vcombine.high %v448, %v448
  %v457 = vcombine.high %v455, %v455
  %v458 = vcombine.high %v402, %v402
  %v460 = vunpack.c.l.s4 1983009808
  %v461 = vunpack.c.0.s8 %v460
  %v462 = vlaneseq
  %v463 = vshrl.u32 %v462, 7
  %v464 = vsub.s32 %v461, %v463
  %v465 = vrot.slane %v402, %v464
  %v467 = vunpack.c.l.s4 1983009808
  %v468 = vunpack.c.0.s8 %v467
  %v469 = vlaneseq
  %v470 = vshrl.u32 %v469, 7
  %v471 = vsub.s32 %v468, %v470
  %v472 = vrot.slane %v458, %v471
  %v473 = vcombine.high %v465, %v465
  %v474 = vcombine.high %v472, %v472
  %vm491 = vcmask 33792
  %492 = vst.msk [vmem:[%s5] sm:$0x3] %vm491, %v414
  %493 = vst.msk [vmem:[%s5 + $0x2] sm:$0x3] %vm491, %v422
  %494 = vst.msk [vmem:[%s5 + $0x4] sm:$0x3] %vm491, %v421
  %495 = vst.msk [vmem:[%s5 + $0x6] sm:$0x3] %vm491, %v423
  %496 = vst.msk [vmem:[%s5 + $0x8] sm:$0x3] %vm491, %v431
  %497 = vst.msk [vmem:[%s5 + $0xa] sm:$0x3] %vm491, %v439
  %498 = vst.msk [vmem:[%s5 + $0xc] sm:$0x3] %vm491, %v438
  %499 = vst.msk [vmem:[%s5 + $0xe] sm:$0x3] %vm491, %v440
  %500 = vst.msk [vmem:[%s5 + $0x10] sm:$0x3] %vm491, %v448
  %501 = vst.msk [vmem:[%s5 + $0x12] sm:$0x3] %vm491, %v456
  %502 = vst.msk [vmem:[%s5 + $0x14] sm:$0x3] %vm491, %v455
  %503 = vst.msk [vmem:[%s5 + $0x16] sm:$0x3] %vm491, %v457
  %504 = vst.msk [vmem:[%s5 + $0x18] sm:$0x3] %vm491, %v465
  %505 = vst.msk [vmem:[%s5 + $0x1a] sm:$0x3] %vm491, %v473
  %506 = vst.msk [vmem:[%s5 + $0x1c] sm:$0x3] %vm491, %v472
  %507 = vst.msk [vmem:[%s5 + $0x1e] sm:$0x3] %vm491, %v474
  // Predicated region
  $region22: #{fel_bilstm_forward.5} parent=0 // pred_check
    _
  $region23: #{fel_bilstm_forward.5} parent=0 // pred_check_branch
    %509 = sbr.rel (0) target = $region25
  $region24: #{fel_bilstm_forward.5} parent=0 // pred_region
    _
  $region25: #{fel_bilstm_forward.5} parent=0 // pred_fallthru
    _
  // Predicated region
  $region26: #{fel_bilstm_forward.5} parent=0 // pred_check
    _
  $region27: #{fel_bilstm_forward.5} parent=0 // pred_check_branch
    %511 = sbr.rel (0) target = $region29
  $region28: #{fel_bilstm_forward.5} parent=0 // pred_region
    _
  $region29: #{fel_bilstm_forward.5} parent=0 // pred_fallthru
    _

// kernel: fel_bilstm_forward.4
$region0: #{fel_bilstm_forward.4}
  #allocation0 [shape = 'u32[]', space=smem, size = 0x4, offset = 0x4, fixed_abs, tag = 'smem constant byte address 0x4 - core index']
  #allocation1 [shape = 'u32[144,128]{1,0:T(1,128)}', space=vmem, size = 0x12000, scoped, tag = 'internal scratch']
  #allocation2 [shape = 'f32[16,2,480]{2,1,0:T(2,128)}', space=vmem, size = 0x10000, scoped, tag = 'scratch operand']
  #allocation3 [shape = 'f32[16,2,60]{2,1,0:T(2,128)}', space=vmem, size = 0x4000, scoped, tag = 'scratch operand']
  #allocation4 [shape = 'f32[16,2,60]{2,1,0:T(2,128)}', space=vmem, size = 0x4000, scoped, tag = 'scratch operand']
  %s0 = inlined_call_operand.vmem [shape: f32[16,2,120], index: 0, kind: input, shape index: {}]
  %s1 = inlined_call_operand.hbm [shape: f32[120,480], index: 1, kind: input, shape index: {}]
  %s2 = inlined_call_operand.vmem [shape: f32[60,240], index: 2, kind: input, shape index: {}]
  %s3 = inlined_call_operand.vmem [shape: f32[60,240], index: 3, kind: input, shape index: {}]
  %s4 = inlined_call_operand.vmem [shape: f32[1,480], index: 4, kind: input, shape index: {}]
  %s5 = inlined_call_operand.vmem [shape: f32[16,2,120], index: 5, kind: output, shape index: {}]
  %s6 = sld [smem:[#allocation0]]
  $region41: #{fel_bilstm_forward.4} parent=0
    _
  %s8 = ssub.s32 1, %s6
  %s9 = scalar_select 0, %s8, %s6
  $region1: #{fel_bilstm_forward.4} parent=0
    #allocation5 [shape = 'u8[245760]{0}', space=vmem, size = 0x3c000, scoped, tag = 'input window, operand 1, single buffered']
    #allocation6 [shape = 's32[1]{0}', space=sflag, size = 0x4, scoped, tag = 'scoped memory for fel_bilstm_forward.4']
    %10 = vsyncpa [#allocation6], 0
    // Predicated region
    $region2: #{fel_bilstm_forward.4} parent=1 // pred_check
      _
    $region3: #{fel_bilstm_forward.4} parent=1 // pred_check_branch
      %12 = sbr.rel (0) target = $region5
    $region4: #{fel_bilstm_forward.4} parent=1 // pred_region
      _
    $region5: #{fel_bilstm_forward.4} parent=1 // pred_fallthru
      _
    // Predicated region
    $region6: #{fel_bilstm_forward.4} parent=1 // pred_check
      _
    $region7: #{fel_bilstm_forward.4} parent=1 // pred_check_branch
      %14 = sbr.rel (0) target = $region9
    $region8: #{fel_bilstm_forward.4} parent=1 // pred_region
      %s16 = ssub.s32 7680, 7680
      %17 = vsyncadd [#allocation6], %s16
      %s18 = sshll.u32 [#allocation5], 4
      %s19 = int_to_ptr.vmem [resolvable:$true] %s18
      %24 = dma.hbm_to_vmem [thread:$0]  %s1, 7680, %s19, [#allocation6], 512, 512, 32
    $region9: #{fel_bilstm_forward.4} parent=1 // pred_fallthru
      _
    // Predicated region
    $region10: #{fel_bilstm_forward.4} parent=1 // pred_check
      _
    $region11: #{fel_bilstm_forward.4} parent=1 // pred_check_branch
      %26 = sbr.rel (0) target = $region13
    $region12: #{fel_bilstm_forward.4} parent=1 // pred_region
      _
    $region13: #{fel_bilstm_forward.4} parent=1 // pred_fallthru
      _
    // Predicated region
    $region14: #{fel_bilstm_forward.4} parent=1 // pred_check
      _
    $region15: #{fel_bilstm_forward.4} parent=1 // pred_check_branch
      %28 = sbr.rel (0) target = $region17
    $region16: #{fel_bilstm_forward.4} parent=1 // pred_region
      _
    $region17: #{fel_bilstm_forward.4} parent=1 // pred_fallthru
      _
    // Predicated region
    $region18: #{fel_bilstm_forward.4} parent=1 // pred_check
      _
    $region19: #{fel_bilstm_forward.4} parent=1 // pred_check_branch
      %30 = sbr.rel (0) target = $region21
    $region20: #{fel_bilstm_forward.4} parent=1 // pred_region
      _
    $region21: #{fel_bilstm_forward.4} parent=1 // pred_fallthru
      _
    // Predicated region
    $region22: #{fel_bilstm_forward.4} parent=1 // pred_check
      _
    $region23: #{fel_bilstm_forward.4} parent=1 // pred_check_branch
      %32 = sbr.rel (0) target = $region25
    $region24: #{fel_bilstm_forward.4} parent=1 // pred_region
      %33 = dma.done [#allocation6], 7680
    $region25: #{fel_bilstm_forward.4} parent=1 // pred_fallthru
      _
    %v34 = vld [vmem:[%s0] sm:$0x3]
    %v35 = vld [vmem:[%s0 + $0x2] sm:$0x3]
    %v36 = vld [vmem:[%s0 + $0x4] sm:$0x3]
    %v37 = vld [vmem:[%s0 + $0x6] sm:$0x3]
    %v38 = vld [vmem:[%s0 + $0x8] sm:$0x3]
    %v39 = vld [vmem:[%s0 + $0xa] sm:$0x3]
    %v40 = vld [vmem:[%s0 + $0xc] sm:$0x3]
    %v41 = vld [vmem:[%s0 + $0xe] sm:$0x3]
    %v42 = vld [vmem:[%s0 + $0x10] sm:$0x3]
    %v43 = vld [vmem:[%s0 + $0x12] sm:$0x3]
    %v44 = vld [vmem:[%s0 + $0x14] sm:$0x3]
    %v45 = vld [vmem:[%s0 + $0x16] sm:$0x3]
    %v46 = vld [vmem:[%s0 + $0x18] sm:$0x3]
    %v47 = vld [vmem:[%s0 + $0x1a] sm:$0x3]
    %v48 = vld [vmem:[%s0 + $0x1c] sm:$0x3]
    %v49 = vld [vmem:[%s0 + $0x1e] sm:$0x3]
    %v50 = vld [vmem:[#allocation5] sm:$0xff]
    %v51 = vld [vmem:[#allocation5 + $0x8] sm:$0xff]
    %v52 = vld [vmem:[#allocation5 + $0x10] sm:$0xff]
    %v53 = vld [vmem:[#allocation5 + $0x18] sm:$0xff]
    %v54 = vld [vmem:[#allocation5 + $0x20] sm:$0xff]
    %v55 = vld [vmem:[#allocation5 + $0x28] sm:$0xff]
    %v56 = vld [vmem:[#allocation5 + $0x30] sm:$0xff]
    %v57 = vld [vmem:[#allocation5 + $0x38] sm:$0xff]
    %v58 = vld [vmem:[#allocation5 + $0x40] sm:$0xff]
    %v59 = vld [vmem:[#allocation5 + $0x48] sm:$0xff]
    %v60 = vld [vmem:[#allocation5 + $0x50] sm:$0xff]
    %v61 = vld [vmem:[#allocation5 + $0x58] sm:$0xff]
    %v62 = vld [vmem:[#allocation5 + $0x60] sm:$0xff]
    %v63 = vld [vmem:[#allocation5 + $0x68] sm:$0xff]
    %v64 = vld [vmem:[#allocation5 + $0x70] sm:$0xff]
    %v65 = vld [vmem:[#allocation5 + $0x78] sm:$0xff]
    %v66 = vld [vmem:[#allocation5 + $0x80] sm:$0xff]
    %v67 = vld [vmem:[#allocation5 + $0x88] sm:$0xff]
    %v68 = vld [vmem:[#allocation5 + $0x90] sm:$0xff]
    %v69 = vld [vmem:[#allocation5 + $0x98] sm:$0xff]
    %v70 = vld [vmem:[#allocation5 + $0xa0] sm:$0xff]
    %v71 = vld [vmem:[#allocation5 + $0xa8] sm:$0xff]
    %v72 = vld [vmem:[#allocation5 + $0xb0] sm:$0xff]
    %v73 = vld [vmem:[#allocation5 + $0xb8] sm:$0xff]
    %v74 = vld [vmem:[#allocation5 + $0xc0] sm:$0xff]
    %v75 = vld [vmem:[#allocation5 + $0xc8] sm:$0xff]
    %v76 = vld [vmem:[#allocation5 + $0xd0] sm:$0xff]
    %v77 = vld [vmem:[#allocation5 + $0xd8] sm:$0xff]
    %v78 = vld [vmem:[#allocation5 + $0xe0] sm:$0xff]
    %v79 = vld [vmem:[#allocation5 + $0xe8] sm:$0xff]
    %v80 = vld [vmem:[#allocation5 + $0xf0] sm:$0xff]
    %v81 = vld [vmem:[#allocation5 + $0xf8] sm:$0xff]
    %v82 = vld [vmem:[#allocation5 + $0x100] sm:$0xff]
    %v83 = vld [vmem:[#allocation5 + $0x108] sm:$0xff]
    %v84 = vld [vmem:[#allocation5 + $0x110] sm:$0xff]
    %v85 = vld [vmem:[#allocation5 + $0x118] sm:$0xff]
    %v86 = vld [vmem:[#allocation5 + $0x120] sm:$0xff]
    %v87 = vld [vmem:[#allocation5 + $0x128] sm:$0xff]
    %v88 = vld [vmem:[#allocation5 + $0x130] sm:$0xff]
    %v89 = vld [vmem:[#allocation5 + $0x138] sm:$0xff]
    %v90 = vld [vmem:[#allocation5 + $0x140] sm:$0xff]
    %v91 = vld [vmem:[#allocation5 + $0x148] sm:$0xff]
    %v92 = vld [vmem:[#allocation5 + $0x150] sm:$0xff]
    %v93 = vld [vmem:[#allocation5 + $0x158] sm:$0xff]
    %v94 = vld [vmem:[#allocation5 + $0x160] sm:$0xff]
    %v95 = vld [vmem:[#allocation5 + $0x168] sm:$0xff]
    %v96 = vld [vmem:[#allocation5 + $0x170] sm:$0xff]
    %v97 = vld [vmem:[#allocation5 + $0x178] sm:$0xff]
    %v98 = vld [vmem:[#allocation5 + $0x180] sm:$0xff]
    %v99 = vld [vmem:[#allocation5 + $0x188] sm:$0xff]
    %v100 = vld [vmem:[#allocation5 + $0x190] sm:$0xff]
    %v101 = vld [vmem:[#allocation5 + $0x198] sm:$0xff]
    %v102 = vld [vmem:[#allocation5 + $0x1a0] sm:$0xff]
    %v103 = vld [vmem:[#allocation5 + $0x1a8] sm:$0xff]
    %v104 = vld [vmem:[#allocation5 + $0x1b0] sm:$0xff]
    %v105 = vld [vmem:[#allocation5 + $0x1b8] sm:$0xff]
    %v106 = vld [vmem:[#allocation5 + $0x1c0] sm:$0xff]
    %v107 = vld [vmem:[#allocation5 + $0x1c8] sm:$0xff]
    %v108 = vld [vmem:[#allocation5 + $0x1d0] sm:$0xff]
    %v109 = vld [vmem:[#allocation5 + $0x1d8] sm:$0xff]
    %v110 = vld [vmem:[%s4] sm:$0xf]
    %v112 = vlaneseq
    %v113 = vshrl.u32 %v112, 7
    %v114 = vsub.s32 0, %v113
    %v115 = vrot.slane %v110, %v114
    %v116 = vlaneseq
    %v117 = vshrl.u32 %v116, 7
    %v118 = vsub.s32 1, %v117
    %v119 = vrot.slane %v110, %v118
    %v120 = vlaneseq
    %v121 = vshrl.u32 %v120, 7
    %v122 = vsub.s32 2, %v121
    %v123 = vrot.slane %v110, %v122
    %v124 = vlaneseq
    %v125 = vshrl.u32 %v124, 7
    %v126 = vsub.s32 3, %v125
    %v127 = vrot.slane %v110, %v126
    %v148 = vcombine.low %v34, %v35
    %v149 = vcombine.low %v36, %v37
    %v151 = vunpack.c.l.s4 1983009808
    %v152 = vunpack.c.0.s8 %v151
    %v153 = vlaneseq
    %v154 = vshrl.u32 %v153, 7
    %v155 = vsub.s32 %v152, %v154
    %v156 = vrot.slane %v148, %v155
    %v158 = vunpack.c.l.s4 1983009808
    %v159 = vunpack.c.0.s8 %v158
    %v160 = vlaneseq
    %v161 = vshrl.u32 %v160, 7
    %v162 = vsub.s32 %v159, %v161
    %v163 = vrot.slane %v149, %v162
    %v164 = vcombine.low %v156, %v163
    %v165 = vcombine.low %v38, %v39
    %v166 = vcombine.low %v40, %v41
    %v168 = vunpack.c.l.s4 1983009808
    %v169 = vunpack.c.0.s8 %v168
    %v170 = vlaneseq
    %v171 = vshrl.u32 %v170, 7
    %v172 = vsub.s32 %v169, %v171
    %v173 = vrot.slane %v165, %v172
    %v175 = vunpack.c.l.s4 1983009808
    %v176 = vunpack.c.0.s8 %v175
    %v177 = vlaneseq
    %v178 = vshrl.u32 %v177, 7
    %v179 = vsub.s32 %v176, %v178
    %v180 = vrot.slane %v166, %v179
    %v181 = vcombine.low %v173, %v180
    %v182 = vcombine.low %v42, %v43
    %v183 = vcombine.low %v44, %v45
    %v185 = vunpack.c.l.s4 1983009808
    %v186 = vunpack.c.0.s8 %v185
    %v187 = vlaneseq
    %v188 = vshrl.u32 %v187, 7
    %v189 = vsub.s32 %v186, %v188
    %v190 = vrot.slane %v182, %v189
    %v192 = vunpack.c.l.s4 1983009808
    %v193 = vunpack.c.0.s8 %v192
    %v194 = vlaneseq
    %v195 = vshrl.u32 %v194, 7
    %v196 = vsub.s32 %v193, %v195
    %v197 = vrot.slane %v183, %v196
    %v198 = vcombine.low %v190, %v197
    %v199 = vcombine.low %v46, %v47
    %v200 = vcombine.low %v48, %v49
    %v202 = vunpack.c.l.s4 1983009808
    %v203 = vunpack.c.0.s8 %v202
    %v204 = vlaneseq
    %v205 = vshrl.u32 %v204, 7
    %v206 = vsub.s32 %v203, %v205
    %v207 = vrot.slane %v199, %v206
    %v209 = vunpack.c.l.s4 1983009808
    %v210 = vunpack.c.0.s8 %v209
    %v211 = vlaneseq
    %v212 = vshrl.u32 %v211, 7
    %v213 = vsub.s32 %v210, %v212
    %v214 = vrot.slane %v200, %v213
    %v215 = vcombine.low %v207, %v214
    %vm216 = vcmask 982016
    %v217 = vsel %vm216, %v164, 0
    %v219 = vsel %vm216, %v181, 0
    %v221 = vsel %vm216, %v198, 0
    %v223 = vsel %vm216, %v215, 0
    %225 = vmatprep.subr.mxu0 %v51
    %226 = vmatpush1.msra.mxu0 %v50
    %227 = vmatprep.subr.mxu0 %v55
    %228 = vmatpush1.msra.mxu0 %v54
    %229 = vmatprep.subr.mxu0 %v59
    %230 = vmatpush1.msra.mxu0 %v58
    %231 = vmatprep.subr.mxu0 %v63
    %232 = vmatpush1.msra.mxu0 %v62
    %233 = vmatprep.subr.mxu0 %v67
    %234 = vmatpush1.msra.mxu0 %v66
    %235 = vmatprep.subr.mxu0 %v71
    %236 = vmatpush1.msra.mxu0 %v70
    %237 = vmatprep.subr.mxu0 %v75
    %238 = vmatpush1.msra.mxu0 %v74
    %239 = vmatprep.subr.mxu0 %v79
    %240 = vmatpush1.msra.mxu0 %v78
    %241 = vmatprep.subr.mxu0 %v83
    %242 = vmatpush1.msra.mxu0 %v82
    %243 = vmatprep.subr.mxu0 %v87
    %244 = vmatpush1.msra.mxu0 %v86
    %245 = vmatprep.subr.mxu0 %v91
    %246 = vmatpush1.msra.mxu0 %v90
    %247 = vmatprep.subr.mxu0 %v95
    %248 = vmatpush1.msra.mxu0 %v94
    %249 = vmatprep.subr.mxu0 %v99
    %250 = vmatpush1.msra.mxu0 %v98
    %251 = vmatprep.subr.mxu0 %v103
    %252 = vmatpush1.msra.mxu0 %v102
    %253 = vmatprep.subr.mxu0 %v107
    %254 = vmatpush1.msra.mxu0 %v106
    %255 = vmatprep.subr.mxu0 0.0
    %256 = vmatpush1.msra.mxu0 0.0
    %257 = vmatprep.subr.mxu0 0.0
    %258 = vmatpush1.msra.mxu0 0.0
    %259 = vmatprep.subr.mxu0 0.0
    %260 = vmatpush1.msra.mxu0 0.0
    %261 = vmatprep.subr.mxu0 0.0
    %262 = vmatpush1.msra.mxu0 0.0
    %263 = vmatprep.subr.mxu0 0.0
    %264 = vmatpush1.msra.mxu0 0.0
    %265 = vmatprep.subr.mxu0 0.0
    %266 = vmatpush1.msra.mxu0 0.0
    %267 = vmatprep.subr.mxu0 0.0
    %268 = vmatpush1.msra.mxu0 0.0
    %269 = vmatprep.subr.mxu0 0.0
    %270 = vmatpush1.msra.mxu0 0.0
    %271 = vmatprep.subr.mxu0 0.0
    %272 = vmatpush1.msra.mxu0 0.0
    %273 = vmatprep.subr.mxu0 0.0
    %274 = vmatpush1.msra.mxu0 0.0
    %275 = vmatprep.subr.mxu0 0.0
    %276 = vmatpush1.msra.mxu0 0.0
    %277 = vmatprep.subr.mxu0 0.0
    %278 = vmatpush1.msra.mxu0 0.0
    %279 = vmatprep.subr.mxu0 0.0
    %280 = vmatpush1.msra.mxu0 0.0
    %281 = vmatprep.subr.mxu0 0.0
    %282 = vmatpush1.msra.mxu0 0.0
    %283 = vmatprep.subr.mxu0 0.0
    %284 = vmatpush1.msra.mxu0 0.0
    %285 = vmatprep.subr.mxu0 0.0
    %286 = vmatpush1.msra.mxu0 0.0
    %287 = vmatprep.subr.mxu0 0.0
    %288 = vmatpush1.msra.mxu0 0.0
    %289 = vmatprep.mubr.f32.mxu0 0.0
    %290 = vmatmul.mubr.f32.gmra.mrb[0].mxu0 %v217
    %v291 = vpop.f32.mrb[0].mxu0
    %v292 = vadd.f32 %v115, %v291
    %v293 = vpop.f32.mrb[0].mxu0
    %v294 = vadd.f32 %v119, %v293
    %295 = vmatprep.mubr.f32.mxu0 0.0
    %296 = vmatmul.mubr.f32.gmra.mrb[0].mxu0 %v219
    %v297 = vpop.f32.mrb[0].mxu0
    %v298 = vadd.f32 %v115, %v297
    %v299 = vpop.f32.mrb[0].mxu0
    %v300 = vadd.f32 %v119, %v299
    %301 = vmatprep.mubr.f32.mxu0 0.0
    %302 = vmatmul.mubr.f32.gmra.mrb[0].mxu0 %v221
    %v303 = vpop.f32.mrb[0].mxu0
    %v304 = vadd.f32 %v115, %v303
    %v305 = vpop.f32.mrb[0].mxu0
    %v306 = vadd.f32 %v119, %v305
    %307 = vmatprep.mubr.f32.mxu0 0.0
    %308 = vmatmul.mubr.f32.gmra.mrb[0].mxu0 %v223
    %v309 = vpop.f32.mrb[0].mxu0
    %v310 = vadd.f32 %v115, %v309
    %v311 = vpop.f32.mrb[0].mxu0
    %v312 = vadd.f32 %v119, %v311
    %313 = vdwg.mxu0
    %314 = vmatprep.subr.mxu0 %v53
    %315 = vmatpush1.msra.mxu0 %v52
    %316 = vmatprep.subr.mxu0 %v57
    %317 = vmatpush1.msra.mxu0 %v56
    %318 = vmatprep.subr.mxu0 %v61
    %319 = vmatpush1.msra.mxu0 %v60
    %320 = vmatprep.subr.mxu0 %v65
    %321 = vmatpush1.msra.mxu0 %v64
    %322 = vmatprep.subr.mxu0 %v69
    %323 = vmatpush1.msra.mxu0 %v68
    %324 = vmatprep.subr.mxu0 %v73
    %325 = vmatpush1.msra.mxu0 %v72
    %326 = vmatprep.subr.mxu0 %v77
    %327 = vmatpush1.msra.mxu0 %v76
    %328 = vmatprep.subr.mxu0 %v81
    %329 = vmatpush1.msra.mxu0 %v80
    %330 = vmatprep.subr.mxu0 %v85
    %331 = vmatpush1.msra.mxu0 %v84
    %332 = vmatprep.subr.mxu0 %v89
    %333 = vmatpush1.msra.mxu0 %v88
    %334 = vmatprep.subr.mxu0 %v93
    %335 = vmatpush1.msra.mxu0 %v92
    %336 = vmatprep.subr.mxu0 %v97
    %337 = vmatpush1.msra.mxu0 %v96
    %338 = vmatprep.subr.mxu0 %v101
    %339 = vmatpush1.msra.mxu0 %v100
    %340 = vmatprep.subr.mxu0 %v105
    %341 = vmatpush1.msra.mxu0 %v104
    %342 = vmatprep.subr.mxu0 %v109
    %343 = vmatpush1.msra.mxu0 %v108
    %344 = vmatprep.subr.mxu0 0.0
    %345 = vmatpush1.msra.mxu0 0.0
    %346 = vmatprep.subr.mxu0 0.0
    %347 = vmatpush1.msra.mxu0 0.0
    %348 = vmatprep.subr.mxu0 0.0
    %349 = vmatpush1.msra.mxu0 0.0
    %350 = vmatprep.subr.mxu0 0.0
    %351 = vmatpush1.msra.mxu0 0.0
    %352 = vmatprep.subr.mxu0 0.0
    %353 = vmatpush1.msra.mxu0 0.0
    %354 = vmatprep.subr.mxu0 0.0
    %355 = vmatpush1.msra.mxu0 0.0
    %356 = vmatprep.subr.mxu0 0.0
    %357 = vmatpush1.msra.mxu0 0.0
    %358 = vmatprep.subr.mxu0 0.0
    %359 = vmatpush1.msra.mxu0 0.0
    %360 = vmatprep.subr.mxu0 0.0
    %361 = vmatpush1.msra.mxu0 0.0
    %362 = vmatprep.subr.mxu0 0.0
    %363 = vmatpush1.msra.mxu0 0.0
    %364 = vmatprep.subr.mxu0 0.0
    %365 = vmatpush1.msra.mxu0 0.0
    %366 = vmatprep.subr.mxu0 0.0
    %367 = vmatpush1.msra.mxu0 0.0
    %368 = vmatprep.subr.mxu0 0.0
    %369 = vmatpush1.msra.mxu0 0.0
    %370 = vmatprep.subr.mxu0 0.0
    %371 = vmatpush1.msra.mxu0 0.0
    %372 = vmatprep.subr.mxu0 0.0
    %373 = vmatpush1.msra.mxu0 0.0
    %374 = vmatprep.subr.mxu0 0.0
    %375 = vmatpush1.msra.mxu0 0.0
    %376 = vmatprep.subr.mxu0 0.0
    %377 = vmatpush1.msra.mxu0 0.0
    %378 = vmatprep.mubr.f32.mxu0 0.0
    %379 = vmatmul.mubr.f32.gmra.mrb[0].mxu0 %v217
    %v380 = vpop.f32.mrb[0].mxu0
    %v381 = vadd.f32 %v123, %v380
    %v382 = vpop.f32.mrb[0].mxu0
    %v383 = vadd.f32 %v127, %v382
    %384 = vmatprep.mubr.f32.mxu0 0.0
    %385 = vmatmul.mubr.f32.gmra.mrb[0].mxu0 %v219
    %v386 = vpop.f32.mrb[0].mxu0
    %v387 = vadd.f32 %v123, %v386
    %v388 = vpop.f32.mrb[0].mxu0
    %v389 = vadd.f32 %v127, %v388
    %390 = vmatprep.mubr.f32.mxu0 0.0
    %391 = vmatmul.mubr.f32.gmra.mrb[0].mxu0 %v221
    %v392 = vpop.f32.mrb[0].mxu0
    %v393 = vadd.f32 %v123, %v392
    %v394 = vpop.f32.mrb[0].mxu0
    %v395 = vadd.f32 %v127, %v394
    %396 = vmatprep.mubr.f32.mxu0 0.0
    %397 = vmatmul.mubr.f32.gmra.mrb[0].mxu0 %v223
    %v398 = vpop.f32.mrb[0].mxu0
    %v399 = vadd.f32 %v123, %v398
    %v400 = vpop.f32.mrb[0].mxu0
    %v401 = vadd.f32 %v127, %v400
    %402 = vdwg.mxu0
    %v419 = vcombine.low %v292, %v294
    %v420 = vcombine.high %v292, %v294
    %v421 = vcombine.low %v381, %v383
    %v422 = vcombine.high %v381, %v383
    %v424 = vunpack.c.l.s4 1983009808
    %v425 = vunpack.c.0.s8 %v424
    %v426 = vlaneseq
    %v427 = vshrl.u32 %v426, 7
    %v428 = vsub.s32 %v425, %v427
    %v429 = vrot.slane %v419, %v428
    %v431 = vunpack.c.l.s4 1983009808
    %v432 = vunpack.c.0.s8 %v431
    %v433 = vlaneseq
    %v434 = vshrl.u32 %v433, 7
    %v435 = vsub.s32 %v432, %v434
    %v436 = vrot.slane %v420, %v435
    %v438 = vunpack.c.l.s4 1983009808
    %v439 = vunpack.c.0.s8 %v438
    %v440 = vlaneseq
    %v441 = vshrl.u32 %v440, 7
    %v442 = vsub.s32 %v439, %v441
    %v443 = vrot.slane %v421, %v442
    %v445 = vunpack.c.l.s4 1983009808
    %v446 = vunpack.c.0.s8 %v445
    %v447 = vlaneseq
    %v448 = vshrl.u32 %v447, 7
    %v449 = vsub.s32 %v446, %v448
    %v450 = vrot.slane %v422, %v449
    %v451 = vcombine.low %v429, %v443
    %v452 = vcombine.high %v429, %v443
    %v453 = vcombine.low %v436, %v450
    %v454 = vcombine.high %v436, %v450
    %v455 = vcombine.low %v298, %v300
    %v456 = vcombine.high %v298, %v300
    %v457 = vcombine.low %v387, %v389
    %v458 = vcombine.high %v387, %v389
    %v460 = vunpack.c.l.s4 1983009808
    %v461 = vunpack.c.0.s8 %v460
    %v462 = vlaneseq
    %v463 = vshrl.u32 %v462, 7
    %v464 = vsub.s32 %v461, %v463
    %v465 = vrot.slane %v455, %v464
    %v467 = vunpack.c.l.s4 1983009808
    %v468 = vunpack.c.0.s8 %v467
    %v469 = vlaneseq
    %v470 = vshrl.u32 %v469, 7
    %v471 = vsub.s32 %v468, %v470
    %v472 = vrot.slane %v456, %v471
    %v474 = vunpack.c.l.s4 1983009808
    %v475 = vunpack.c.0.s8 %v474
    %v476 = vlaneseq
    %v477 = vshrl.u32 %v476, 7
    %v478 = vsub.s32 %v475, %v477
    %v479 = vrot.slane %v457, %v478
    %v481 = vunpack.c.l.s4 1983009808
    %v482 = vunpack.c.0.s8 %v481
    %v483 = vlaneseq
    %v484 = vshrl.u32 %v483, 7
    %v485 = vsub.s32 %v482, %v484
    %v486 = vrot.slane %v458, %v485
    %v487 = vcombine.low %v465, %v479
    %v488 = vcombine.high %v465, %v479
    %v489 = vcombine.low %v472, %v486
    %v490 = vcombine.high %v472, %v486
    %v491 = vcombine.low %v304, %v306
    %v492 = vcombine.high %v304, %v306
    %v493 = vcombine.low %v393, %v395
    %v494 = vcombine.high %v393, %v395
    %v496 = vunpack.c.l.s4 1983009808
    %v497 = vunpack.c.0.s8 %v496
    %v498 = vlaneseq
    %v499 = vshrl.u32 %v498, 7
    %v500 = vsub.s32 %v497, %v499
    %v501 = vrot.slane %v491, %v500
    %v503 = vunpack.c.l.s4 1983009808
    %v504 = vunpack.c.0.s8 %v503
    %v505 = vlaneseq
    %v506 = vshrl.u32 %v505, 7
    %v507 = vsub.s32 %v504, %v506
    %v508 = vrot.slane %v492, %v507
    %v510 = vunpack.c.l.s4 1983009808
    %v511 = vunpack.c.0.s8 %v510
    %v512 = vlaneseq
    %v513 = vshrl.u32 %v512, 7
    %v514 = vsub.s32 %v511, %v513
    %v515 = vrot.slane %v493, %v514
    %v517 = vunpack.c.l.s4 1983009808
    %v518 = vunpack.c.0.s8 %v517
    %v519 = vlaneseq
    %v520 = vshrl.u32 %v519, 7
    %v521 = vsub.s32 %v518, %v520
    %v522 = vrot.slane %v494, %v521
    %v523 = vcombine.low %v501, %v515
    %v524 = vcombine.high %v501, %v515
    %v525 = vcombine.low %v508, %v522
    %v526 = vcombine.high %v508, %v522
    %v527 = vcombine.low %v310, %v312
    %v528 = vcombine.high %v310, %v312
    %v529 = vcombine.low %v399, %v401
    %v530 = vcombine.high %v399, %v401
    %v532 = vunpack.c.l.s4 1983009808
    %v533 = vunpack.c.0.s8 %v532
    %v534 = vlaneseq
    %v535 = vshrl.u32 %v534, 7
    %v536 = vsub.s32 %v533, %v535
    %v537 = vrot.slane %v527, %v536
    %v539 = vunpack.c.l.s4 1983009808
    %v540 = vunpack.c.0.s8 %v539
    %v541 = vlaneseq
    %v542 = vshrl.u32 %v541, 7
    %v543 = vsub.s32 %v540, %v542
    %v544 = vrot.slane %v528, %v543
    %v546 = vunpack.c.l.s4 1983009808
    %v547 = vunpack.c.0.s8 %v546
    %v548 = vlaneseq
    %v549 = vshrl.u32 %v548, 7
    %v550 = vsub.s32 %v547, %v549
    %v551 = vrot.slane %v529, %v550
    %v553 = vunpack.c.l.s4 1983009808
    %v554 = vunpack.c.0.s8 %v553
    %v555 = vlaneseq
    %v556 = vshrl.u32 %v555, 7
    %v557 = vsub.s32 %v554, %v556
    %v558 = vrot.slane %v530, %v557
    %v559 = vcombine.low %v537, %v551
    %v560 = vcombine.high %v537, %v551
    %v561 = vcombine.low %v544, %v558
    %v562 = vcombine.high %v544, %v558
    %vm579 = vcmask 1041408
    %vm580 = vcmask 1043458
    %vm581 = vmor %vm580, %vm579
    %vm582 = vcmask 1045508
    %vm583 = vmor %vm582, %vm581
    %vm584 = vcmask 785414
    %vm585 = vmor %vm584, %vm583
    %586 = vst.msk [vmem:[#allocation2] sm:$0xff] %vm585, %v451
    %587 = vst.msk [vmem:[#allocation2 + $0x8] sm:$0xff] %vm585, %v452
    %588 = vst.msk [vmem:[#allocation2 + $0x10] sm:$0xff] %vm585, %v453
    %589 = vst.msk [vmem:[#allocation2 + $0x18] sm:$0xff] %vm585, %v454
    %590 = vst.msk [vmem:[#allocation2 + $0x20] sm:$0xff] %vm585, %v487
    %591 = vst.msk [vmem:[#allocation2 + $0x28] sm:$0xff] %vm585, %v488
    %592 = vst.msk [vmem:[#allocation2 + $0x30] sm:$0xff] %vm585, %v489
    %593 = vst.msk [vmem:[#allocation2 + $0x38] sm:$0xff] %vm585, %v490
    %594 = vst.msk [vmem:[#allocation2 + $0x40] sm:$0xff] %vm585, %v523
    %595 = vst.msk [vmem:[#allocation2 + $0x48] sm:$0xff] %vm585, %v524
    %596 = vst.msk [vmem:[#allocation2 + $0x50] sm:$0xff] %vm585, %v525
    %597 = vst.msk [vmem:[#allocation2 + $0x58] sm:$0xff] %vm585, %v526
    %598 = vst.msk [vmem:[#allocation2 + $0x60] sm:$0xff] %vm585, %v559
    %599 = vst.msk [vmem:[#allocation2 + $0x68] sm:$0xff] %vm585, %v560
    %600 = vst.msk [vmem:[#allocation2 + $0x70] sm:$0xff] %vm585, %v561
    %601 = vst.msk [vmem:[#allocation2 + $0x78] sm:$0xff] %vm585, %v562
    %v602 = vld [vmem:[%s2] sm:$0xff]
    %v603 = vld [vmem:[%s2 + $0x8] sm:$0xff]
    %v604 = vld [vmem:[%s2 + $0x10] sm:$0xff]
    %v605 = vld [vmem:[%s2 + $0x18] sm:$0xff]
    %v606 = vld [vmem:[%s2 + $0x20] sm:$0xff]
    %v607 = vld [vmem:[%s2 + $0x28] sm:$0xff]
    %v608 = vld [vmem:[%s2 + $0x30] sm:$0xff]
    %v609 = vld [vmem:[%s2 + $0x38] sm:$0xff]
    %v610 = vld [vmem:[%s2 + $0x40] sm:$0xff]
    %v611 = vld [vmem:[%s2 + $0x48] sm:$0xff]
    %v612 = vld [vmem:[%s2 + $0x50] sm:$0xff]
    %v613 = vld [vmem:[%s2 + $0x58] sm:$0xff]
    %v614 = vld [vmem:[%s2 + $0x60] sm:$0xff]
    %v615 = vld [vmem:[%s2 + $0x68] sm:$0xff]
    %v616 = vld [vmem:[%s2 + $0x70] sm:$0xf]
    %v617 = vld [vmem:[%s2 + $0x78] sm:$0xf]
    %v618 = vld [vmem:[%s3] sm:$0xff]
    %v619 = vld [vmem:[%s3 + $0x8] sm:$0xff]
    %v620 = vld [vmem:[%s3 + $0x10] sm:$0xff]
    %v621 = vld [vmem:[%s3 + $0x18] sm:$0xff]
    %v622 = vld [vmem:[%s3 + $0x20] sm:$0xff]
    %v623 = vld [vmem:[%s3 + $0x28] sm:$0xff]
    %v624 = vld [vmem:[%s3 + $0x30] sm:$0xff]
    %v625 = vld [vmem:[%s3 + $0x38] sm:$0xff]
    %v626 = vld [vmem:[%s3 + $0x40] sm:$0xff]
    %v627 = vld [vmem:[%s3 + $0x48] sm:$0xff]
    %v628 = vld [vmem:[%s3 + $0x50] sm:$0xff]
    %v629 = vld [vmem:[%s3 + $0x58] sm:$0xff]
    %v630 = vld [vmem:[%s3 + $0x60] sm:$0xff]
    %v631 = vld [vmem:[%s3 + $0x68] sm:$0xff]
    %v632 = vld [vmem:[%s3 + $0x70] sm:$0xf]
    %v633 = vld [vmem:[%s3 + $0x78] sm:$0xf]
    loop: start=0, step=1, limit=16
    $region26: #{fel_bilstm_forward.4} parent=1 // loop_pre_header
      _
    $region27: #{fel_bilstm_forward.4} parent=1 // loop_header
      %s635 = sphi 0, %s639
      %p636 = scmp.ge.s32.totalorder %s635, 16
      %v640 = vphi 0.0, %v884
      %v641 = vphi 0.0, %v878
      %v642 = vphi 0.0, %v921
      %v643 = vphi 0.0, %v915
    $region28: #{fel_bilstm_forward.4} parent=1 // loop_header_branch
      %638 = sbr.rel (%p636) target = $region32
    $region29: #{fel_bilstm_forward.4} parent=1 // loop_body
      %s644 = ssub.s32 15, %s635
      %s645 = smul.u32 %s635, 4
      %s646 = smul.addr %s645, 2
      %s647 = scalar_lea.vmem [#allocation2], %s646
      %v648 = vld [vmem:[%s647] sm:$0xff]
      %vm649 = vcmask 490496
      %v651 = vsel %vm649, %v640, 0
      %vm653 = vcmask 1043456
      %v655 = vsel %vm653, %v616, 0
      %v658 = vsel %vm653, %v617, 0
      %660 = vmatprep.subr.mxu0 %v603
      %661 = vmatpush1.msra.mxu0 %v602
      %662 = vmatprep.subr.mxu0 %v605
      %663 = vmatpush1.msra.mxu0 %v604
      %664 = vmatprep.subr.mxu0 %v607
      %665 = vmatpush1.msra.mxu0 %v606
      %666 = vmatprep.subr.mxu0 %v609
      %667 = vmatpush1.msra.mxu0 %v608
      %668 = vmatprep.subr.mxu0 %v611
      %669 = vmatpush1.msra.mxu0 %v610
      %670 = vmatprep.subr.mxu0 %v613
      %671 = vmatpush1.msra.mxu0 %v612
      %672 = vmatprep.subr.mxu0 %v615
      %673 = vmatpush1.msra.mxu0 %v614
      %674 = vmatprep.subr.mxu0 %v658
      %675 = vmatpush1.msra.mxu0 %v655
      %676 = vmatprep.subr.mxu0 0.0
      %677 = vmatpush1.msra.mxu0 0.0
      %678 = vmatprep.subr.mxu0 0.0
      %679 = vmatpush1.msra.mxu0 0.0
      %680 = vmatprep.subr.mxu0 0.0
      %681 = vmatpush1.msra.mxu0 0.0
      %682 = vmatprep.subr.mxu0 0.0
      %683 = vmatpush1.msra.mxu0 0.0
      %684 = vmatprep.subr.mxu0 0.0
      %685 = vmatpush1.msra.mxu0 0.0
      %686 = vmatprep.subr.mxu0 0.0
      %687 = vmatpush1.msra.mxu0 0.0
      %688 = vmatprep.subr.mxu0 0.0
      %689 = vmatpush1.msra.mxu0 0.0
      %690 = vmatprep.subr.mxu0 0.0
      %691 = vmatpush1.msra.mxu0 0.0
      %692 = vmatprep.subr.mxu0 0.0
      %693 = vmatpush1.msra.mxu0 0.0
      %694 = vmatprep.subr.mxu0 0.0
      %695 = vmatpush1.msra.mxu0 0.0
      %696 = vmatprep.subr.mxu0 0.0
      %697 = vmatpush1.msra.mxu0 0.0
      %698 = vmatprep.subr.mxu0 0.0
      %699 = vmatpush1.msra.mxu0 0.0
      %700 = vmatprep.subr.mxu0 0.0
      %701 = vmatpush1.msra.mxu0 0.0
      %702 = vmatprep.subr.mxu0 0.0
      %703 = vmatpush1.msra.mxu0 0.0
      %704 = vmatprep.subr.mxu0 0.0
      %705 = vmatpush1.msra.mxu0 0.0
      %706 = vmatprep.subr.mxu0 0.0
      %707 = vmatpush1.msra.mxu0 0.0
      %708 = vmatprep.subr.mxu0 0.0
      %709 = vmatpush1.msra.mxu0 0.0
      %710 = vmatprep.subr.mxu0 0.0
      %711 = vmatpush1.msra.mxu0 0.0
      %712 = vmatprep.subr.mxu0 0.0
      %713 = vmatpush1.msra.mxu0 0.0
      %714 = vmatprep.subr.mxu0 0.0
      %715 = vmatpush1.msra.mxu0 0.0
      %716 = vmatprep.subr.mxu0 0.0
      %717 = vmatpush1.msra.mxu0 0.0
      %718 = vmatprep.subr.mxu0 0.0
      %719 = vmatpush1.msra.mxu0 0.0
      %720 = vmatprep.subr.mxu0 0.0
      %721 = vmatpush1.msra.mxu0 0.0
      %722 = vmatprep.subr.mxu0 0.0
      %723 = vmatpush1.msra.mxu0 0.0
      %724 = vmatprep.mubr.f32.mxu0 0.0
      %725 = vmatmul.mubr.f32.gmra.mrb[0].mxu0 %v651
      %v726 = vpop.f32.mrb[0].mxu0
      %v727 = vadd.f32 0.0, %v726
      %v728 = vpop.f32.mrb[0].mxu0
      %v729 = vadd.f32 0.0, %v728
      %730 = vdwg.mxu0
      %v733 = vcombine.low %v727, %v729
      %v735 = vunpack.c.l.s4 1983009808
      %v736 = vunpack.c.0.s8 %v735
      %v737 = vlaneseq
      %v738 = vshrl.u32 %v737, 7
      %v739 = vsub.s32 %v736, %v738
      %v740 = vrot.slane %v733, %v739
      %v742 = vadd.f32 %v648, %v740
      %s743 = smul.u32 %s644, 4
      %s744 = smul.addr %s743, 2
      %s745 = scalar_lea.vmem [#allocation2], %s744
      %v746 = vld [vmem:[%s745] sm:$0xff]
      %v748 = vsel %vm649, %v642, 0
      %v751 = vsel %vm653, %v632, 0
      %v754 = vsel %vm653, %v633, 0
      %756 = vmatprep.subr.mxu0 %v619
      %757 = vmatpush1.msra.mxu0 %v618
      %758 = vmatprep.subr.mxu0 %v621
      %759 = vmatpush1.msra.mxu0 %v620
      %760 = vmatprep.subr.mxu0 %v623
      %761 = vmatpush1.msra.mxu0 %v622
      %762 = vmatprep.subr.mxu0 %v625
      %763 = vmatpush1.msra.mxu0 %v624
      %764 = vmatprep.subr.mxu0 %v627
      %765 = vmatpush1.msra.mxu0 %v626
      %766 = vmatprep.subr.mxu0 %v629
      %767 = vmatpush1.msra.mxu0 %v628
      %768 = vmatprep.subr.mxu0 %v631
      %769 = vmatpush1.msra.mxu0 %v630
      %770 = vmatprep.subr.mxu0 %v754
      %771 = vmatpush1.msra.mxu0 %v751
      %772 = vmatprep.subr.mxu0 0.0
      %773 = vmatpush1.msra.mxu0 0.0
      %774 = vmatprep.subr.mxu0 0.0
      %775 = vmatpush1.msra.mxu0 0.0
      %776 = vmatprep.subr.mxu0 0.0
      %777 = vmatpush1.msra.mxu0 0.0
      %778 = vmatprep.subr.mxu0 0.0
      %779 = vmatpush1.msra.mxu0 0.0
      %780 = vmatprep.subr.mxu0 0.0
      %781 = vmatpush1.msra.mxu0 0.0
      %782 = vmatprep.subr.mxu0 0.0
      %783 = vmatpush1.msra.mxu0 0.0
      %784 = vmatprep.subr.mxu0 0.0
      %785 = vmatpush1.msra.mxu0 0.0
      %786 = vmatprep.subr.mxu0 0.0
      %787 = vmatpush1.msra.mxu0 0.0
      %788 = vmatprep.subr.mxu0 0.0
      %789 = vmatpush1.msra.mxu0 0.0
      %790 = vmatprep.subr.mxu0 0.0
      %791 = vmatpush1.msra.mxu0 0.0
      %792 = vmatprep.subr.mxu0 0.0
      %793 = vmatpush1.msra.mxu0 0.0
      %794 = vmatprep.subr.mxu0 0.0
      %795 = vmatpush1.msra.mxu0 0.0
      %796 = vmatprep.subr.mxu0 0.0
      %797 = vmatpush1.msra.mxu0 0.0
      %798 = vmatprep.subr.mxu0 0.0
      %799 = vmatpush1.msra.mxu0 0.0
      %800 = vmatprep.subr.mxu0 0.0
      %801 = vmatpush1.msra.mxu0 0.0
      %802 = vmatprep.subr.mxu0 0.0
      %803 = vmatpush1.msra.mxu0 0.0
      %804 = vmatprep.subr.mxu0 0.0
      %805 = vmatpush1.msra.mxu0 0.0
      %806 = vmatprep.subr.mxu0 0.0
      %807 = vmatpush1.msra.mxu0 0.0
      %808 = vmatprep.subr.mxu0 0.0
      %809 = vmatpush1.msra.mxu0 0.0
      %810 = vmatprep.subr.mxu0 0.0
      %811 = vmatpush1.msra.mxu0 0.0
      %812 = vmatprep.subr.mxu0 0.0
      %813 = vmatpush1.msra.mxu0 0.0
      %814 = vmatprep.subr.mxu0 0.0
      %815 = vmatpush1.msra.mxu0 0.0
      %816 = vmatprep.subr.mxu0 0.0
      %817 = vmatpush1.msra.mxu0 0.0
      %818 = vmatprep.subr.mxu0 0.0
      %819 = vmatpush1.msra.mxu0 0.0
      %820 = vmatprep.mubr.f32.mxu0 0.0
      %821 = vmatmul.mubr.f32.gmra.mrb[0].mxu0 %v748
      %v822 = vpop.f32.mrb[0].mxu0
      %v823 = vadd.f32 0.0, %v822
      %v824 = vpop.f32.mrb[0].mxu0
      %v825 = vadd.f32 0.0, %v824
      %826 = vdwg.mxu0
      %828 = vrot.lane.b32.xlu0 %v746, 16
      %v829 = vpop.permute.xlu0 %828
      %v830 = vrot.slane %v829, 2
      %v831 = vrot.slane %v829, 4
      %vm832 = vcmask 130048
      %v833 = vsel %vm832, %v830, %v831
      %v837 = vcombine.low %v823, %v825
      %v839 = vunpack.c.l.s4 1983009808
      %v840 = vunpack.c.0.s8 %v839
      %v841 = vlaneseq
      %v842 = vshrl.u32 %v841, 7
      %v843 = vsub.s32 %v840, %v842
      %v844 = vrot.slane %v837, %v843
      %v846 = vadd.f32 %v833, %v844
      %v847 = vxor.u32 %v742, 2147483648
      %v848 = vmul.f32 %v847, 1.442695
      %v849 = vpow.pop %v848
      %v850 = vadd.f32 %v849, 1.0
      %v851 = vrcp.pop %v850
      %v852 = vmul.f32 1.0, %v851
      %v853 = vtanh.pop %v742
      %855 = vrot.lane.b32.xlu0 %v742, 76
      %v856 = vpop.permute.xlu0 %855
      %v857 = vrot.slane %v856, 2
      %v859 = vxor.u32 %v857, 2147483648
      %v860 = vmul.f32 %v859, 1.442695
      %v861 = vpow.pop %v860
      %v862 = vadd.f32 %v861, 1.0
      %v863 = vrcp.pop %v862
      %v864 = vmul.f32 1.0, %v863
      %v865 = vmul.f32 %v852, %v641
      %867 = vrot.lane.b32.xlu0 %v853, 8
      %v868 = vpop.permute.xlu0 %867
      %v869 = vrot.slane %v868, 2
      %vm870 = vcmask 64512
      %v871 = vsel %vm870, %v868, %v869
      %v873 = vmul.f32 %v852, %v871
      %875 = vrot.lane.b32.xlu0 %v873, 60
      %v876 = vpop.permute.xlu0 %875
      %v878 = vadd.f32 %v865, %v876
      %v879 = vtanh.pop %v878
      %881 = vrot.lane.b32.xlu0 %v879, 68
      %v882 = vpop.permute.xlu0 %881
      %v884 = vmul.f32 %v864, %v882
      %v885 = vxor.u32 %v846, 2147483648
      %v886 = vmul.f32 %v885, 1.442695
      %v887 = vpow.pop %v886
      %v888 = vadd.f32 %v887, 1.0
      %v889 = vrcp.pop %v888
      %v890 = vmul.f32 1.0, %v889
      %v891 = vtanh.pop %v846
      %893 = vrot.lane.b32.xlu0 %v846, 76
      %v894 = vpop.permute.xlu0 %893
      %v895 = vrot.slane %v894, 2
      %v897 = vxor.u32 %v895, 2147483648
      %v898 = vmul.f32 %v897, 1.442695
      %v899 = vpow.pop %v898
      %v900 = vadd.f32 %v899, 1.0
      %v901 = vrcp.pop %v900
      %v902 = vmul.f32 1.0, %v901
      %v903 = vmul.f32 %v890, %v643
      %905 = vrot.lane.b32.xlu0 %v891, 8
      %v906 = vpop.permute.xlu0 %905
      %v907 = vrot.slane %v906, 2
      %v908 = vsel %vm870, %v906, %v907
      %v910 = vmul.f32 %v890, %v908
      %912 = vrot.lane.b32.xlu0 %v910, 60
      %v913 = vpop.permute.xlu0 %912
      %v915 = vadd.f32 %v903, %v913
      %v916 = vtanh.pop %v915
      %918 = vrot.lane.b32.xlu0 %v916, 68
      %v919 = vpop.permute.xlu0 %918
      %v921 = vmul.f32 %v902, %v919
      %s922 = smul.u32 %s635, 2
      %s923 = scalar_lea.vmem [#allocation3], %s922
      %vm924 = vcmask 484352
      %925 = vst.msk [vmem:[%s923] sm:$0x3] %vm924, %v884
      %s926 = smul.u32 %s644, 2
      %s927 = scalar_lea.vmem [#allocation4], %s926
      %928 = vst.msk [vmem:[%s927] sm:$0x3] %vm924, %v921
    $region30: #{fel_bilstm_forward.4} parent=1 // loop_footer
      %s639 = sadd.s32 1, %s635
    $region31: #{fel_bilstm_forward.4} parent=1 // loop_footer_branch
      %634 = sbr.rel target = $region27
    $region32: #{fel_bilstm_forward.4} parent=1 // loop_exit
      _
    %v929 = vld [vmem:[#allocation3] sm:$0x3]
    %v930 = vld [vmem:[#allocation3 + $0x2] sm:$0x3]
    %v931 = vld [vmem:[#allocation3 + $0x4] sm:$0x3]
    %v932 = vld [vmem:[#allocation3 + $0x6] sm:$0x3]
    %v933 = vld [vmem:[#allocation3 + $0x8] sm:$0x3]
    %v934 = vld [vmem:[#allocation3 + $0xa] sm:$0x3]
    %v935 = vld [vmem:[#allocation3 + $0xc] sm:$0x3]
    %v936 = vld [vmem:[#allocation3 + $0xe] sm:$0x3]
    %v937 = vld [vmem:[#allocation3 + $0x10] sm:$0x3]
    %v938 = vld [vmem:[#allocation3 + $0x12] sm:$0x3]
    %v939 = vld [vmem:[#allocation3 + $0x14] sm:$0x3]
    %v940 = vld [vmem:[#allocation3 + $0x16] sm:$0x3]
    %v941 = vld [vmem:[#allocation3 + $0x18] sm:$0x3]
    %v942 = vld [vmem:[#allocation3 + $0x1a] sm:$0x3]
    %v943 = vld [vmem:[#allocation3 + $0x1c] sm:$0x3]
    %v944 = vld [vmem:[#allocation3 + $0x1e] sm:$0x3]
    %vm945 = vcmask 484352
    %946 = vst.msk [vmem:[%s5] sm:$0x3] %vm945, %v929
    %947 = vst.msk [vmem:[%s5 + $0x2] sm:$0x3] %vm945, %v930
    %948 = vst.msk [vmem:[%s5 + $0x4] sm:$0x3] %vm945, %v931
    %949 = vst.msk [vmem:[%s5 + $0x6] sm:$0x3] %vm945, %v932
    %950 = vst.msk [vmem:[%s5 + $0x8] sm:$0x3] %vm945, %v933
    %951 = vst.msk [vmem:[%s5 + $0xa] sm:$0x3] %vm945, %v934
    %952 = vst.msk [vmem:[%s5 + $0xc] sm:$0x3] %vm945, %v935
    %953 = vst.msk [vmem:[%s5 + $0xe] sm:$0x3] %vm945, %v936
    %954 = vst.msk [vmem:[%s5 + $0x10] sm:$0x3] %vm945, %v937
    %955 = vst.msk [vmem:[%s5 + $0x12] sm:$0x3] %vm945, %v938
    %956 = vst.msk [vmem:[%s5 + $0x14] sm:$0x3] %vm945, %v939
    %957 = vst.msk [vmem:[%s5 + $0x16] sm:$0x3] %vm945, %v940
    %958 = vst.msk [vmem:[%s5 + $0x18] sm:$0x3] %vm945, %v941
    %959 = vst.msk [vmem:[%s5 + $0x1a] sm:$0x3] %vm945, %v942
    %960 = vst.msk [vmem:[%s5 + $0x1c] sm:$0x3] %vm945, %v943
    %961 = vst.msk [vmem:[%s5 + $0x1e] sm:$0x3] %vm945, %v944
    %v962 = vld [vmem:[#allocation4] sm:$0x3]
    %v963 = vld [vmem:[#allocation4 + $0x2] sm:$0x3]
    %v964 = vld [vmem:[#allocation4 + $0x4] sm:$0x3]
    %v965 = vld [vmem:[#allocation4 + $0x6] sm:$0x3]
    %v966 = vld [vmem:[#allocation4 + $0x8] sm:$0x3]
    %v967 = vld [vmem:[#allocation4 + $0xa] sm:$0x3]
    %v968 = vld [vmem:[#allocation4 + $0xc] sm:$0x3]
    %v969 = vld [vmem:[#allocation4 + $0xe] sm:$0x3]
    %v970 = vld [vmem:[#allocation4 + $0x10] sm:$0x3]
    %v971 = vld [vmem:[#allocation4 + $0x12] sm:$0x3]
    %v972 = vld [vmem:[#allocation4 + $0x14] sm:$0x3]
    %v973 = vld [vmem:[#allocation4 + $0x16] sm:$0x3]
    %v974 = vld [vmem:[#allocation4 + $0x18] sm:$0x3]
    %v975 = vld [vmem:[#allocation4 + $0x1a] sm:$0x3]
    %v976 = vld [vmem:[#allocation4 + $0x1c] sm:$0x3]
    %v977 = vld [vmem:[#allocation4 + $0x1e] sm:$0x3]
    %994 = vrot.lane.b32.xlu0 %v962, 60
    %v995 = vpop.permute.xlu0 %994
    %996 = vrot.lane.b32.xlu0 %v963, 60
    %v997 = vpop.permute.xlu0 %996
    %998 = vrot.lane.b32.xlu0 %v964, 60
    %v999 = vpop.permute.xlu0 %998
    %1000 = vrot.lane.b32.xlu0 %v965, 60
    %v1001 = vpop.permute.xlu0 %1000
    %1002 = vrot.lane.b32.xlu0 %v966, 60
    %v1003 = vpop.permute.xlu0 %1002
    %1004 = vrot.lane.b32.xlu0 %v967, 60
    %v1005 = vpop.permute.xlu0 %1004
    %1006 = vrot.lane.b32.xlu0 %v968, 60
    %v1007 = vpop.permute.xlu0 %1006
    %1008 = vrot.lane.b32.xlu0 %v969, 60
    %v1009 = vpop.permute.xlu0 %1008
    %1010 = vrot.lane.b32.xlu0 %v970, 60
    %v1011 = vpop.permute.xlu0 %1010
    %1012 = vrot.lane.b32.xlu0 %v971, 60
    %v1013 = vpop.permute.xlu0 %1012
    %1014 = vrot.lane.b32.xlu0 %v972, 60
    %v1015 = vpop.permute.xlu0 %1014
    %1016 = vrot.lane.b32.xlu0 %v973, 60
    %v1017 = vpop.permute.xlu0 %1016
    %1018 = vrot.lane.b32.xlu0 %v974, 60
    %v1019 = vpop.permute.xlu0 %1018
    %1020 = vrot.lane.b32.xlu0 %v975, 60
    %v1021 = vpop.permute.xlu0 %1020
    %1022 = vrot.lane.b32.xlu0 %v976, 60
    %v1023 = vpop.permute.xlu0 %1022
    %1024 = vrot.lane.b32.xlu0 %v977, 60
    %v1025 = vpop.permute.xlu0 %1024
    %vm1042 = vcmask 976352
    %1043 = vst.msk [vmem:[%s5] sm:$0x3] %vm1042, %v995
    %1044 = vst.msk [vmem:[%s5 + $0x2] sm:$0x3] %vm1042, %v997
    %1045 = vst.msk [vmem:[%s5 + $0x4] sm:$0x3] %vm1042, %v999
    %1046 = vst.msk [vmem:[%s5 + $0x6] sm:$0x3] %vm1042, %v1001
    %1047 = vst.msk [vmem:[%s5 + $0x8] sm:$0x3] %vm1042, %v1003
    %1048 = vst.msk [vmem:[%s5 + $0xa] sm:$0x3] %vm1042, %v1005
    %1049 = vst.msk [vmem:[%s5 + $0xc] sm:$0x3] %vm1042, %v1007
    %1050 = vst.msk [vmem:[%s5 + $0xe] sm:$0x3] %vm1042, %v1009
    %1051 = vst.msk [vmem:[%s5 + $0x10] sm:$0x3] %vm1042, %v1011
    %1052 = vst.msk [vmem:[%s5 + $0x12] sm:$0x3] %vm1042, %v1013
    %1053 = vst.msk [vmem:[%s5 + $0x14] sm:$0x3] %vm1042, %v1015
    %1054 = vst.msk [vmem:[%s5 + $0x16] sm:$0x3] %vm1042, %v1017
    %1055 = vst.msk [vmem:[%s5 + $0x18] sm:$0x3] %vm1042, %v1019
    %1056 = vst.msk [vmem:[%s5 + $0x1a] sm:$0x3] %vm1042, %v1021
    %1057 = vst.msk [vmem:[%s5 + $0x1c] sm:$0x3] %vm1042, %v1023
    %1058 = vst.msk [vmem:[%s5 + $0x1e] sm:$0x3] %vm1042, %v1025
    // Predicated region
    $region33: #{fel_bilstm_forward.4} parent=1 // pred_check
      _
    $region34: #{fel_bilstm_forward.4} parent=1 // pred_check_branch
      %1060 = sbr.rel (0) target = $region36
    $region35: #{fel_bilstm_forward.4} parent=1 // pred_region
      _
    $region36: #{fel_bilstm_forward.4} parent=1 // pred_fallthru
      _
    // Predicated region
    $region37: #{fel_bilstm_forward.4} parent=1 // pred_check
      _
    $region38: #{fel_bilstm_forward.4} parent=1 // pred_check_branch
      %1062 = sbr.rel (0) target = $region40
    $region39: #{fel_bilstm_forward.4} parent=1 // pred_region
      _
    $region40: #{fel_bilstm_forward.4} parent=1 // pred_fallthru
      _
    %1063 = vsyncpa [#allocation6], 1

// kernel: fel_bilstm_forward.3
$region0: #{fel_bilstm_forward.3}
  #allocation0 [shape = 'u32[]', space=smem, size = 0x4, offset = 0x4, fixed_abs, tag = 'smem constant byte address 0x4 - core index']
  #allocation1 [shape = 'u32[144,128]{1,0:T(1,128)}', space=vmem, size = 0x12000, scoped, tag = 'internal scratch']
  #allocation2 [shape = 'f32[16,2,480]{2,1,0:T(2,128)}', space=vmem, size = 0x10000, scoped, tag = 'scratch operand']
  #allocation3 [shape = 'f32[16,2,60]{2,1,0:T(2,128)}', space=vmem, size = 0x4000, scoped, tag = 'scratch operand']
  #allocation4 [shape = 'f32[16,2,60]{2,1,0:T(2,128)}', space=vmem, size = 0x4000, scoped, tag = 'scratch operand']
  %s0 = inlined_call_operand.vmem [shape: f32[16,2,4], index: 0, kind: input, shape index: {}]
  %s1 = inlined_call_operand.vmem [shape: f32[4,480], index: 1, kind: input, shape index: {}]
  %s2 = inlined_call_operand.hbm [shape: f32[60,240], index: 2, kind: input, shape index: {}]
  %s3 = inlined_call_operand.hbm [shape: f32[60,240], index: 3, kind: input, shape index: {}]
  %s4 = inlined_call_operand.vmem [shape: f32[1,480], index: 4, kind: input, shape index: {}]
  %s5 = inlined_call_operand.vmem [shape: f32[16,2,120], index: 5, kind: output, shape index: {}]
  %s6 = sld [smem:[#allocation0]]
  $region45: #{fel_bilstm_forward.3} parent=0
    _
  %s8 = ssub.s32 1, %s6
  %s9 = scalar_select 0, %s8, %s6
  $region1: #{fel_bilstm_forward.3} parent=0
    #allocation5 [shape = 'u8[65536]{0}', space=vmem, size = 0x10000, scoped, tag = 'input window, operand 2, single buffered']
    #allocation6 [shape = 's32[1]{0}', space=sflag, size = 0x4, scoped, tag = 'scoped memory for fel_bilstm_forward.3']
    #allocation7 [shape = 'u8[65536]{0}', space=vmem, size = 0x10000, scoped, tag = 'input window, operand 3, single buffered']
    #allocation8 [shape = 's32[1]{0}', space=sflag, size = 0x4, scoped, tag = 'scoped memory for fel_bilstm_forward.3']
    %10 = vsyncpa [#allocation6], 0
    %11 = vsyncpa [#allocation8], 0
    // Predicated region
    $region2: #{fel_bilstm_forward.3} parent=1 // pred_check
      _
    $region3: #{fel_bilstm_forward.3} parent=1 // pred_check_branch
      %13 = sbr.rel (0) target = $region5
    $region4: #{fel_bilstm_forward.3} parent=1 // pred_region
      _
    $region5: #{fel_bilstm_forward.3} parent=1 // pred_fallthru
      _
    // Predicated region
    $region6: #{fel_bilstm_forward.3} parent=1 // pred_check
      _
    $region7: #{fel_bilstm_forward.3} parent=1 // pred_check_branch
      %15 = sbr.rel (0) target = $region9
    $region8: #{fel_bilstm_forward.3} parent=1 // pred_region
      _
    $region9: #{fel_bilstm_forward.3} parent=1 // pred_fallthru
      _
    // Predicated region
    $region10: #{fel_bilstm_forward.3} parent=1 // pred_check
      _
    $region11: #{fel_bilstm_forward.3} parent=1 // pred_check_branch
      %17 = sbr.rel (0) target = $region13
    $region12: #{fel_bilstm_forward.3} parent=1 // pred_region
      %s19 = ssub.s32 2048, 2048
      %20 = vsyncadd [#allocation6], %s19
      %s21 = sshll.u32 [#allocation5], 4
      %s22 = int_to_ptr.vmem [resolvable:$true] %s21
      %27 = dma.hbm_to_vmem [thread:$0]  %s2, 2048, %s22, [#allocation6], 256, 256, 16
    $region13: #{fel_bilstm_forward.3} parent=1 // pred_fallthru
      _
    // Predicated region
    $region14: #{fel_bilstm_forward.3} parent=1 // pred_check
      _
    $region15: #{fel_bilstm_forward.3} parent=1 // pred_check_branch
      %29 = sbr.rel (0) target = $region17
    $region16: #{fel_bilstm_forward.3} parent=1 // pred_region
      %s31 = ssub.s32 2048, 2048
      %32 = vsyncadd [#allocation8], %s31
      %s33 = sshll.u32 [#allocation7], 4
      %s34 = int_to_ptr.vmem [resolvable:$true] %s33
      %39 = dma.hbm_to_vmem [thread:$0]  %s3, 2048, %s34, [#allocation8], 256, 256, 16
    $region17: #{fel_bilstm_forward.3} parent=1 // pred_fallthru
      _
    // Predicated region
    $region18: #{fel_bilstm_forward.3} parent=1 // pred_check
      _
    $region19: #{fel_bilstm_forward.3} parent=1 // pred_check_branch
      %41 = sbr.rel (0) target = $region21
    $region20: #{fel_bilstm_forward.3} parent=1 // pred_region
      _
    $region21: #{fel_bilstm_forward.3} parent=1 // pred_fallthru
      _
    // Predicated region
    $region22: #{fel_bilstm_forward.3} parent=1 // pred_check
      _
    $region23: #{fel_bilstm_forward.3} parent=1 // pred_check_branch
      %43 = sbr.rel (0) target = $region25
    $region24: #{fel_bilstm_forward.3} parent=1 // pred_region
      %44 = dma.done [#allocation6], 2048
    $region25: #{fel_bilstm_forward.3} parent=1 // pred_fallthru
      _
    // Predicated region
    $region26: #{fel_bilstm_forward.3} parent=1 // pred_check
      _
    $region27: #{fel_bilstm_forward.3} parent=1 // pred_check_branch
      %46 = sbr.rel (0) target = $region29
    $region28: #{fel_bilstm_forward.3} parent=1 // pred_region
      %47 = dma.done [#allocation8], 2048
    $region29: #{fel_bilstm_forward.3} parent=1 // pred_fallthru
      _
    %v48 = vld [vmem:[%s0] sm:$0x3]
    %v49 = vld [vmem:[%s0 + $0x2] sm:$0x3]
    %v50 = vld [vmem:[%s0 + $0x4] sm:$0x3]
    %v51 = vld [vmem:[%s0 + $0x6] sm:$0x3]
    %v52 = vld [vmem:[%s0 + $0x8] sm:$0x3]
    %v53 = vld [vmem:[%s0 + $0xa] sm:$0x3]
    %v54 = vld [vmem:[%s0 + $0xc] sm:$0x3]
    %v55 = vld [vmem:[%s0 + $0xe] sm:$0x3]
    %v56 = vld [vmem:[%s0 + $0x10] sm:$0x3]
    %v57 = vld [vmem:[%s0 + $0x12] sm:$0x3]
    %v58 = vld [vmem:[%s0 + $0x14] sm:$0x3]
    %v59 = vld [vmem:[%s0 + $0x16] sm:$0x3]
    %v60 = vld [vmem:[%s0 + $0x18] sm:$0x3]
    %v61 = vld [vmem:[%s0 + $0x1a] sm:$0x3]
    %v62 = vld [vmem:[%s0 + $0x1c] sm:$0x3]
    %v63 = vld [vmem:[%s0 + $0x1e] sm:$0x3]
    %v64 = vld [vmem:[%s1] sm:$0xff]
    %v65 = vld [vmem:[%s1 + $0x8] sm:$0xff]
    %v66 = vld [vmem:[%s4] sm:$0xf]
    %v68 = vlaneseq
    %v69 = vshrl.u32 %v68, 7
    %v70 = vsub.s32 0, %v69
    %v71 = vrot.slane %v66, %v70
    %v72 = vlaneseq
    %v73 = vshrl.u32 %v72, 7
    %v74 = vsub.s32 1, %v73
    %v75 = vrot.slane %v66, %v74
    %v76 = vlaneseq
    %v77 = vshrl.u32 %v76, 7
    %v78 = vsub.s32 2, %v77
    %v79 = vrot.slane %v66, %v78
    %v80 = vlaneseq
    %v81 = vshrl.u32 %v80, 7
    %v82 = vsub.s32 3, %v81
    %v83 = vrot.slane %v66, %v82
    %v104 = vcombine.low %v48, %v49
    %v105 = vcombine.low %v50, %v51
    %v107 = vunpack.c.l.s4 1983009808
    %v108 = vunpack.c.0.s8 %v107
    %v109 = vlaneseq
    %v110 = vshrl.u32 %v109, 7
    %v111 = vsub.s32 %v108, %v110
    %v112 = vrot.slane %v104, %v111
    %v114 = vunpack.c.l.s4 1983009808
    %v115 = vunpack.c.0.s8 %v114
    %v116 = vlaneseq
    %v117 = vshrl.u32 %v116, 7
    %v118 = vsub.s32 %v115, %v117
    %v119 = vrot.slane %v105, %v118
    %v120 = vcombine.low %v112, %v119
    %v121 = vcombine.low %v52, %v53
    %v122 = vcombine.low %v54, %v55
    %v124 = vunpack.c.l.s4 1983009808
    %v125 = vunpack.c.0.s8 %v124
    %v126 = vlaneseq
    %v127 = vshrl.u32 %v126, 7
    %v128 = vsub.s32 %v125, %v127
    %v129 = vrot.slane %v121, %v128
    %v131 = vunpack.c.l.s4 1983009808
    %v132 = vunpack.c.0.s8 %v131
    %v133 = vlaneseq
    %v134 = vshrl.u32 %v133, 7
    %v135 = vsub.s32 %v132, %v134
    %v136 = vrot.slane %v122, %v135
    %v137 = vcombine.low %v129, %v136
    %v138 = vcombine.low %v56, %v57
    %v139 = vcombine.low %v58, %v59
    %v141 = vunpack.c.l.s4 1983009808
    %v142 = vunpack.c.0.s8 %v141
    %v143 = vlaneseq
    %v144 = vshrl.u32 %v143, 7
    %v145 = vsub.s32 %v142, %v144
    %v146 = vrot.slane %v138, %v145
    %v148 = vunpack.c.l.s4 1983009808
    %v149 = vunpack.c.0.s8 %v148
    %v150 = vlaneseq
    %v151 = vshrl.u32 %v150, 7
    %v152 = vsub.s32 %v149, %v151
    %v153 = vrot.slane %v139, %v152
    %v154 = vcombine.low %v146, %v153
    %v155 = vcombine.low %v60, %v61
    %v156 = vcombine.low %v62, %v63
    %v158 = vunpack.c.l.s4 1983009808
    %v159 = vunpack.c.0.s8 %v158
    %v160 = vlaneseq
    %v161 = vshrl.u32 %v160, 7
    %v162 = vsub.s32 %v159, %v161
    %v163 = vrot.slane %v155, %v162
    %v165 = vunpack.c.l.s4 1983009808
    %v166 = vunpack.c.0.s8 %v165
    %v167 = vlaneseq
    %v168 = vshrl.u32 %v167, 7
    %v169 = vsub.s32 %v166, %v168
    %v170 = vrot.slane %v156, %v169
    %v171 = vcombine.low %v163, %v170
    %v174 = vcombine.high %v64, %v64
    %v175 = vcombine.high %v65, %v65
    %vm176 = vcmask 31744
    %v177 = vsel %vm176, %v120, 0
    %v179 = vsel %vm176, %v137, 0
    %v181 = vsel %vm176, %v154, 0
    %v183 = vsel %vm176, %v171, 0
    %vm185 = vcmask 1043456
    %v186 = vsel %vm185, %v64, 0
    %v188 = vsel %vm185, %v174, 0
    %v190 = vsel %vm185, %v65, 0
    %v192 = vsel %vm185, %v175, 0
    %194 = vmatprep.subr.mxu0 %v188
    %195 = vmatpush1.msra.mxu0 %v186
    %196 = vmatprep.subr.mxu0 0.0
    %197 = vmatpush1.msra.mxu0 0.0
    %198 = vmatprep.subr.mxu0 0.0
    %199 = vmatpush1.msra.mxu0 0.0
    %200 = vmatprep.subr.mxu0 0.0
    %201 = vmatpush1.msra.mxu0 0.0
    %202 = vmatprep.subr.mxu0 0.0
    %203 = vmatpush1.msra.mxu0 0.0
    %204 = vmatprep.subr.mxu0 0.0
    %205 = vmatpush1.msra.mxu0 0.0
    %206 = vmatprep.subr.mxu0 0.0
    %207 = vmatpush1.msra.mxu0 0.0
    %208 = vmatprep.subr.mxu0 0.0
    %209 = vmatpush1.msra.mxu0 0.0
    %210 = vmatprep.subr.mxu0 0.0
    %211 = vmatpush1.msra.mxu0 0.0
    %212 = vmatprep.subr.mxu0 0.0
    %213 = vmatpush1.msra.mxu0 0.0
    %214 = vmatprep.subr.mxu0 0.0
    %215 = vmatpush1.msra.mxu0 0.0
    %216 = vmatprep.subr.mxu0 0.0
    %217 = vmatpush1.msra.mxu0 0.0
    %218 = vmatprep.subr.mxu0 0.0
    %219 = vmatpush1.msra.mxu0 0.0
    %220 = vmatprep.subr.mxu0 0.0
    %221 = vmatpush1.msra.mxu0 0.0
    %222 = vmatprep.subr.mxu0 0.0
    %223 = vmatpush1.msra.mxu0 0.0
    %224 = vmatprep.subr.mxu0 0.0
    %225 = vmatpush1.msra.mxu0 0.0
    %226 = vmatprep.subr.mxu0 0.0
    %227 = vmatpush1.msra.mxu0 0.0
    %228 = vmatprep.subr.mxu0 0.0
    %229 = vmatpush1.msra.mxu0 0.0
    %230 = vmatprep.subr.mxu0 0.0
    %231 = vmatpush1.msra.mxu0 0.0
    %232 = vmatprep.subr.mxu0 0.0
    %233 = vmatpush1.msra.mxu0 0.0
    %234 = vmatprep.subr.mxu0 0.0
    %235 = vmatpush1.msra.mxu0 0.0
    %236 = vmatprep.subr.mxu0 0.0
    %237 = vmatpush1.msra.mxu0 0.0
    %238 = vmatprep.subr.mxu0 0.0
    %239 = vmatpush1.msra.mxu0 0.0
    %240 = vmatprep.subr.mxu0 0.0
    %241 = vmatpush1.msra.mxu0 0.0
    %242 = vmatprep.subr.mxu0 0.0
    %243 = vmatpush1.msra.mxu0 0.0
    %244 = vmatprep.subr.mxu0 0.0
    %245 = vmatpush1.msra.mxu0 0.0
    %246 = vmatprep.subr.mxu0 0.0
    %247 = vmatpush1.msra.mxu0 0.0
    %248 = vmatprep.subr.mxu0 0.0
    %249 = vmatpush1.msra.mxu0 0.0
    %250 = vmatprep.subr.mxu0 0.0
    %251 = vmatpush1.msra.mxu0 0.0
    %252 = vmatprep.subr.mxu0 0.0
    %253 = vmatpush1.msra.mxu0 0.0
    %254 = vmatprep.subr.mxu0 0.0
    %255 = vmatpush1.msra.mxu0 0.0
    %256 = vmatprep.subr.mxu0 0.0
    %257 = vmatpush1.msra.mxu0 0.0
    %258 = vmatprep.mubr.f32.mxu0 0.0
    %259 = vmatmul.mubr.f32.gmra.mrb[0].mxu0 %v177
    %v260 = vpop.f32.mrb[0].mxu0
    %v261 = vadd.f32 %v71, %v260
    %v262 = vpop.f32.mrb[0].mxu0
    %v263 = vadd.f32 %v75, %v262
    %264 = vmatprep.mubr.f32.mxu0 0.0
    %265 = vmatmul.mubr.f32.gmra.mrb[0].mxu0 %v179
    %v266 = vpop.f32.mrb[0].mxu0
    %v267 = vadd.f32 %v71, %v266
    %v268 = vpop.f32.mrb[0].mxu0
    %v269 = vadd.f32 %v75, %v268
    %270 = vmatprep.mubr.f32.mxu0 0.0
    %271 = vmatmul.mubr.f32.gmra.mrb[0].mxu0 %v181
    %v272 = vpop.f32.mrb[0].mxu0
    %v273 = vadd.f32 %v71, %v272
    %v274 = vpop.f32.mrb[0].mxu0
    %v275 = vadd.f32 %v75, %v274
    %276 = vmatprep.mubr.f32.mxu0 0.0
    %277 = vmatmul.mubr.f32.gmra.mrb[0].mxu0 %v183
    %v278 = vpop.f32.mrb[0].mxu0
    %v279 = vadd.f32 %v71, %v278
    %v280 = vpop.f32.mrb[0].mxu0
    %v281 = vadd.f32 %v75, %v280
    %282 = vdwg.mxu0
    %283 = vmatprep.subr.mxu0 %v192
    %284 = vmatpush1.msra.mxu0 %v190
    %285 = vmatprep.subr.mxu0 0.0
    %286 = vmatpush1.msra.mxu0 0.0
    %287 = vmatprep.subr.mxu0 0.0
    %288 = vmatpush1.msra.mxu0 0.0
    %289 = vmatprep.subr.mxu0 0.0
    %290 = vmatpush1.msra.mxu0 0.0
    %291 = vmatprep.subr.mxu0 0.0
    %292 = vmatpush1.msra.mxu0 0.0
    %293 = vmatprep.subr.mxu0 0.0
    %294 = vmatpush1.msra.mxu0 0.0
    %295 = vmatprep.subr.mxu0 0.0
    %296 = vmatpush1.msra.mxu0 0.0
    %297 = vmatprep.subr.mxu0 0.0
    %298 = vmatpush1.msra.mxu0 0.0
    %299 = vmatprep.subr.mxu0 0.0
    %300 = vmatpush1.msra.mxu0 0.0
    %301 = vmatprep.subr.mxu0 0.0
    %302 = vmatpush1.msra.mxu0 0.0
    %303 = vmatprep.subr.mxu0 0.0
    %304 = vmatpush1.msra.mxu0 0.0
    %305 = vmatprep.subr.mxu0 0.0
    %306 = vmatpush1.msra.mxu0 0.0
    %307 = vmatprep.subr.mxu0 0.0
    %308 = vmatpush1.msra.mxu0 0.0
    %309 = vmatprep.subr.mxu0 0.0
    %310 = vmatpush1.msra.mxu0 0.0
    %311 = vmatprep.subr.mxu0 0.0
    %312 = vmatpush1.msra.mxu0 0.0
    %313 = vmatprep.subr.mxu0 0.0
    %314 = vmatpush1.msra.mxu0 0.0
    %315 = vmatprep.subr.mxu0 0.0
    %316 = vmatpush1.msra.mxu0 0.0
    %317 = vmatprep.subr.mxu0 0.0
    %318 = vmatpush1.msra.mxu0 0.0
    %319 = vmatprep.subr.mxu0 0.0
    %320 = vmatpush1.msra.mxu0 0.0
    %321 = vmatprep.subr.mxu0 0.0
    %322 = vmatpush1.msra.mxu0 0.0
    %323 = vmatprep.subr.mxu0 0.0
    %324 = vmatpush1.msra.mxu0 0.0
    %325 = vmatprep.subr.mxu0 0.0
    %326 = vmatpush1.msra.mxu0 0.0
    %327 = vmatprep.subr.mxu0 0.0
    %328 = vmatpush1.msra.mxu0 0.0
    %329 = vmatprep.subr.mxu0 0.0
    %330 = vmatpush1.msra.mxu0 0.0
    %331 = vmatprep.subr.mxu0 0.0
    %332 = vmatpush1.msra.mxu0 0.0
    %333 = vmatprep.subr.mxu0 0.0
    %334 = vmatpush1.msra.mxu0 0.0
    %335 = vmatprep.subr.mxu0 0.0
    %336 = vmatpush1.msra.mxu0 0.0
    %337 = vmatprep.subr.mxu0 0.0
    %338 = vmatpush1.msra.mxu0 0.0
    %339 = vmatprep.subr.mxu0 0.0
    %340 = vmatpush1.msra.mxu0 0.0
    %341 = vmatprep.subr.mxu0 0.0
    %342 = vmatpush1.msra.mxu0 0.0
    %343 = vmatprep.subr.mxu0 0.0
    %344 = vmatpush1.msra.mxu0 0.0
    %345 = vmatprep.subr.mxu0 0.0
    %346 = vmatpush1.msra.mxu0 0.0
    %347 = vmatprep.mubr.f32.mxu0 0.0
    %348 = vmatmul.mubr.f32.gmra.mrb[0].mxu0 %v177
    %v349 = vpop.f32.mrb[0].mxu0
    %v350 = vadd.f32 %v79, %v349
    %v351 = vpop.f32.mrb[0].mxu0
    %v352 = vadd.f32 %v83, %v351
    %353 = vmatprep.mubr.f32.mxu0 0.0
    %354 = vmatmul.mubr.f32.gmra.mrb[0].mxu0 %v179
    %v355 = vpop.f32.mrb[0].mxu0
    %v356 = vadd.f32 %v79, %v355
    %v357 = vpop.f32.mrb[0].mxu0
    %v358 = vadd.f32 %v83, %v357
    %359 = vmatprep.mubr.f32.mxu0 0.0
    %360 = vmatmul.mubr.f32.gmra.mrb[0].mxu0 %v181
    %v361 = vpop.f32.mrb[0].mxu0
    %v362 = vadd.f32 %v79, %v361
    %v363 = vpop.f32.mrb[0].mxu0
    %v364 = vadd.f32 %v83, %v363
    %365 = vmatprep.mubr.f32.mxu0 0.0
    %366 = vmatmul.mubr.f32.gmra.mrb[0].mxu0 %v183
    %v367 = vpop.f32.mrb[0].mxu0
    %v368 = vadd.f32 %v79, %v367
    %v369 = vpop.f32.mrb[0].mxu0
    %v370 = vadd.f32 %v83, %v369
    %371 = vdwg.mxu0
    %v388 = vcombine.low %v261, %v263
    %v389 = vcombine.high %v261, %v263
    %v390 = vcombine.low %v350, %v352
    %v391 = vcombine.high %v350, %v352
    %v393 = vunpack.c.l.s4 1983009808
    %v394 = vunpack.c.0.s8 %v393
    %v395 = vlaneseq
    %v396 = vshrl.u32 %v395, 7
    %v397 = vsub.s32 %v394, %v396
    %v398 = vrot.slane %v388, %v397
    %v400 = vunpack.c.l.s4 1983009808
    %v401 = vunpack.c.0.s8 %v400
    %v402 = vlaneseq
    %v403 = vshrl.u32 %v402, 7
    %v404 = vsub.s32 %v401, %v403
    %v405 = vrot.slane %v389, %v404
    %v407 = vunpack.c.l.s4 1983009808
    %v408 = vunpack.c.0.s8 %v407
    %v409 = vlaneseq
    %v410 = vshrl.u32 %v409, 7
    %v411 = vsub.s32 %v408, %v410
    %v412 = vrot.slane %v390, %v411
    %v414 = vunpack.c.l.s4 1983009808
    %v415 = vunpack.c.0.s8 %v414
    %v416 = vlaneseq
    %v417 = vshrl.u32 %v416, 7
    %v418 = vsub.s32 %v415, %v417
    %v419 = vrot.slane %v391, %v418
    %v420 = vcombine.low %v398, %v412
    %v421 = vcombine.high %v398, %v412
    %v422 = vcombine.low %v405, %v419
    %v423 = vcombine.high %v405, %v419
    %v424 = vcombine.low %v267, %v269
    %v425 = vcombine.high %v267, %v269
    %v426 = vcombine.low %v356, %v358
    %v427 = vcombine.high %v356, %v358
    %v429 = vunpack.c.l.s4 1983009808
    %v430 = vunpack.c.0.s8 %v429
    %v431 = vlaneseq
    %v432 = vshrl.u32 %v431, 7
    %v433 = vsub.s32 %v430, %v432
    %v434 = vrot.slane %v424, %v433
    %v436 = vunpack.c.l.s4 1983009808
    %v437 = vunpack.c.0.s8 %v436
    %v438 = vlaneseq
    %v439 = vshrl.u32 %v438, 7
    %v440 = vsub.s32 %v437, %v439
    %v441 = vrot.slane %v425, %v440
    %v443 = vunpack.c.l.s4 1983009808
    %v444 = vunpack.c.0.s8 %v443
    %v445 = vlaneseq
    %v446 = vshrl.u32 %v445, 7
    %v447 = vsub.s32 %v444, %v446
    %v448 = vrot.slane %v426, %v447
    %v450 = vunpack.c.l.s4 1983009808
    %v451 = vunpack.c.0.s8 %v450
    %v452 = vlaneseq
    %v453 = vshrl.u32 %v452, 7
    %v454 = vsub.s32 %v451, %v453
    %v455 = vrot.slane %v427, %v454
    %v456 = vcombine.low %v434, %v448
    %v457 = vcombine.high %v434, %v448
    %v458 = vcombine.low %v441, %v455
    %v459 = vcombine.high %v441, %v455
    %v460 = vcombine.low %v273, %v275
    %v461 = vcombine.high %v273, %v275
    %v462 = vcombine.low %v362, %v364
    %v463 = vcombine.high %v362, %v364
    %v465 = vunpack.c.l.s4 1983009808
    %v466 = vunpack.c.0.s8 %v465
    %v467 = vlaneseq
    %v468 = vshrl.u32 %v467, 7
    %v469 = vsub.s32 %v466, %v468
    %v470 = vrot.slane %v460, %v469
    %v472 = vunpack.c.l.s4 1983009808
    %v473 = vunpack.c.0.s8 %v472
    %v474 = vlaneseq
    %v475 = vshrl.u32 %v474, 7
    %v476 = vsub.s32 %v473, %v475
    %v477 = vrot.slane %v461, %v476
    %v479 = vunpack.c.l.s4 1983009808
    %v480 = vunpack.c.0.s8 %v479
    %v481 = vlaneseq
    %v482 = vshrl.u32 %v481, 7
    %v483 = vsub.s32 %v480, %v482
    %v484 = vrot.slane %v462, %v483
    %v486 = vunpack.c.l.s4 1983009808
    %v487 = vunpack.c.0.s8 %v486
    %v488 = vlaneseq
    %v489 = vshrl.u32 %v488, 7
    %v490 = vsub.s32 %v487, %v489
    %v491 = vrot.slane %v463, %v490
    %v492 = vcombine.low %v470, %v484
    %v493 = vcombine.high %v470, %v484
    %v494 = vcombine.low %v477, %v491
    %v495 = vcombine.high %v477, %v491
    %v496 = vcombine.low %v279, %v281
    %v497 = vcombine.high %v279, %v281
    %v498 = vcombine.low %v368, %v370
    %v499 = vcombine.high %v368, %v370
    %v501 = vunpack.c.l.s4 1983009808
    %v502 = vunpack.c.0.s8 %v501
    %v503 = vlaneseq
    %v504 = vshrl.u32 %v503, 7
    %v505 = vsub.s32 %v502, %v504
    %v506 = vrot.slane %v496, %v505
    %v508 = vunpack.c.l.s4 1983009808
    %v509 = vunpack.c.0.s8 %v508
    %v510 = vlaneseq
    %v511 = vshrl.u32 %v510, 7
    %v512 = vsub.s32 %v509, %v511
    %v513 = vrot.slane %v497, %v512
    %v515 = vunpack.c.l.s4 1983009808
    %v516 = vunpack.c.0.s8 %v515
    %v517 = vlaneseq
    %v518 = vshrl.u32 %v517, 7
    %v519 = vsub.s32 %v516, %v518
    %v520 = vrot.slane %v498, %v519
    %v522 = vunpack.c.l.s4 1983009808
    %v523 = vunpack.c.0.s8 %v522
    %v524 = vlaneseq
    %v525 = vshrl.u32 %v524, 7
    %v526 = vsub.s32 %v523, %v525
    %v527 = vrot.slane %v499, %v526
    %v528 = vcombine.low %v506, %v520
    %v529 = vcombine.high %v506, %v520
    %v530 = vcombine.low %v513, %v527
    %v531 = vcombine.high %v513, %v527
    %vm548 = vcmask 1041408
    %vm549 = vcmask 1043458
    %vm550 = vmor %vm549, %vm548
    %vm551 = vcmask 1045508
    %vm552 = vmor %vm551, %vm550
    %vm553 = vcmask 785414
    %vm554 = vmor %vm553, %vm552
    %555 = vst.msk [vmem:[#allocation2] sm:$0xff] %vm554, %v420
    %556 = vst.msk [vmem:[#allocation2 + $0x8] sm:$0xff] %vm554, %v421
    %557 = vst.msk [vmem:[#allocation2 + $0x10] sm:$0xff] %vm554, %v422
    %558 = vst.msk [vmem:[#allocation2 + $0x18] sm:$0xff] %vm554, %v423
    %559 = vst.msk [vmem:[#allocation2 + $0x20] sm:$0xff] %vm554, %v456
    %560 = vst.msk [vmem:[#allocation2 + $0x28] sm:$0xff] %vm554, %v457
    %561 = vst.msk [vmem:[#allocation2 + $0x30] sm:$0xff] %vm554, %v458
    %562 = vst.msk [vmem:[#allocation2 + $0x38] sm:$0xff] %vm554, %v459
    %563 = vst.msk [vmem:[#allocation2 + $0x40] sm:$0xff] %vm554, %v492
    %564 = vst.msk [vmem:[#allocation2 + $0x48] sm:$0xff] %vm554, %v493
    %565 = vst.msk [vmem:[#allocation2 + $0x50] sm:$0xff] %vm554, %v494
    %566 = vst.msk [vmem:[#allocation2 + $0x58] sm:$0xff] %vm554, %v495
    %567 = vst.msk [vmem:[#allocation2 + $0x60] sm:$0xff] %vm554, %v528
    %568 = vst.msk [vmem:[#allocation2 + $0x68] sm:$0xff] %vm554, %v529
    %569 = vst.msk [vmem:[#allocation2 + $0x70] sm:$0xff] %vm554, %v530
    %570 = vst.msk [vmem:[#allocation2 + $0x78] sm:$0xff] %vm554, %v531
    %v571 = vld [vmem:[#allocation5] sm:$0xff]
    %v572 = vld [vmem:[#allocation5 + $0x8] sm:$0xff]
    %v573 = vld [vmem:[#allocation5 + $0x10] sm:$0xff]
    %v574 = vld [vmem:[#allocation5 + $0x18] sm:$0xff]
    %v575 = vld [vmem:[#allocation5 + $0x20] sm:$0xff]
    %v576 = vld [vmem:[#allocation5 + $0x28] sm:$0xff]
    %v577 = vld [vmem:[#allocation5 + $0x30] sm:$0xff]
    %v578 = vld [vmem:[#allocation5 + $0x38] sm:$0xff]
    %v579 = vld [vmem:[#allocation5 + $0x40] sm:$0xff]
    %v580 = vld [vmem:[#allocation5 + $0x48] sm:$0xff]
    %v581 = vld [vmem:[#allocation5 + $0x50] sm:$0xff]
    %v582 = vld [vmem:[#allocation5 + $0x58] sm:$0xff]
    %v583 = vld [vmem:[#allocation5 + $0x60] sm:$0xff]
    %v584 = vld [vmem:[#allocation5 + $0x68] sm:$0xff]
    %v585 = vld [vmem:[#allocation5 + $0x70] sm:$0xf]
    %v586 = vld [vmem:[#allocation5 + $0x78] sm:$0xf]
    %v587 = vld [vmem:[#allocation7] sm:$0xff]
    %v588 = vld [vmem:[#allocation7 + $0x8] sm:$0xff]
    %v589 = vld [vmem:[#allocation7 + $0x10] sm:$0xff]
    %v590 = vld [vmem:[#allocation7 + $0x18] sm:$0xff]
    %v591 = vld [vmem:[#allocation7 + $0x20] sm:$0xff]
    %v592 = vld [vmem:[#allocation7 + $0x28] sm:$0xff]
    %v593 = vld [vmem:[#allocation7 + $0x30] sm:$0xff]
    %v594 = vld [vmem:[#allocation7 + $0x38] sm:$0xff]
    %v595 = vld [vmem:[#allocation7 + $0x40] sm:$0xff]
    %v596 = vld [vmem:[#allocation7 + $0x48] sm:$0xff]
    %v597 = vld [vmem:[#allocation7 + $0x50] sm:$0xff]
    %v598 = vld [vmem:[#allocation7 + $0x58] sm:$0xff]
    %v599 = vld [vmem:[#allocation7 + $0x60] sm:$0xff]
    %v600 = vld [vmem:[#allocation7 + $0x68] sm:$0xff]
    %v601 = vld [vmem:[#allocation7 + $0x70] sm:$0xf]
    %v602 = vld [vmem:[#allocation7 + $0x78] sm:$0xf]
    loop: start=0, step=1, limit=16
    $region30: #{fel_bilstm_forward.3} parent=1 // loop_pre_header
      _
    $region31: #{fel_bilstm_forward.3} parent=1 // loop_header
      %s604 = sphi 0, %s608
      %p605 = scmp.ge.s32.totalorder %s604, 16
      %v609 = vphi 0.0, %v852
      %v610 = vphi 0.0, %v846
      %v611 = vphi 0.0, %v889
      %v612 = vphi 0.0, %v883
    $region32: #{fel_bilstm_forward.3} parent=1 // loop_header_branch
      %607 = sbr.rel (%p605) target = $region36
    $region33: #{fel_bilstm_forward.3} parent=1 // loop_body
      %s613 = ssub.s32 15, %s604
      %s614 = smul.u32 %s604, 4
      %s615 = smul.addr %s614, 2
      %s616 = scalar_lea.vmem [#allocation2], %s615
      %v617 = vld [vmem:[%s616] sm:$0xff]
      %vm618 = vcmask 490496
      %v620 = vsel %vm618, %v609, 0
      %v623 = vsel %vm185, %v585, 0
      %v626 = vsel %vm185, %v586, 0
      %628 = vmatprep.subr.mxu0 %v572
      %629 = vmatpush1.msra.mxu0 %v571
      %630 = vmatprep.subr.mxu0 %v574
      %631 = vmatpush1.msra.mxu0 %v573
      %632 = vmatprep.subr.mxu0 %v576
      %633 = vmatpush1.msra.mxu0 %v575
      %634 = vmatprep.subr.mxu0 %v578
      %635 = vmatpush1.msra.mxu0 %v577
      %636 = vmatprep.subr.mxu0 %v580
      %637 = vmatpush1.msra.mxu0 %v579
      %638 = vmatprep.subr.mxu0 %v582
      %639 = vmatpush1.msra.mxu0 %v581
      %640 = vmatprep.subr.mxu0 %v584
      %641 = vmatpush1.msra.mxu0 %v583
      %642 = vmatprep.subr.mxu0 %v626
      %643 = vmatpush1.msra.mxu0 %v623
      %644 = vmatprep.subr.mxu0 0.0
      %645 = vmatpush1.msra.mxu0 0.0
      %646 = vmatprep.subr.mxu0 0.0
      %647 = vmatpush1.msra.mxu0 0.0
      %648 = vmatprep.subr.mxu0 0.0
      %649 = vmatpush1.msra.mxu0 0.0
      %650 = vmatprep.subr.mxu0 0.0
      %651 = vmatpush1.msra.mxu0 0.0
      %652 = vmatprep.subr.mxu0 0.0
      %653 = vmatpush1.msra.mxu0 0.0
      %654 = vmatprep.subr.mxu0 0.0
      %655 = vmatpush1.msra.mxu0 0.0
      %656 = vmatprep.subr.mxu0 0.0
      %657 = vmatpush1.msra.mxu0 0.0
      %658 = vmatprep.subr.mxu0 0.0
      %659 = vmatpush1.msra.mxu0 0.0
      %660 = vmatprep.subr.mxu0 0.0
      %661 = vmatpush1.msra.mxu0 0.0
      %662 = vmatprep.subr.mxu0 0.0
      %663 = vmatpush1.msra.mxu0 0.0
      %664 = vmatprep.subr.mxu0 0.0
      %665 = vmatpush1.msra.mxu0 0.0
      %666 = vmatprep.subr.mxu0 0.0
      %667 = vmatpush1.msra.mxu0 0.0
      %668 = vmatprep.subr.mxu0 0.0
      %669 = vmatpush1.msra.mxu0 0.0
      %670 = vmatprep.subr.mxu0 0.0
      %671 = vmatpush1.msra.mxu0 0.0
      %672 = vmatprep.subr.mxu0 0.0
      %673 = vmatpush1.msra.mxu0 0.0
      %674 = vmatprep.subr.mxu0 0.0
      %675 = vmatpush1.msra.mxu0 0.0
      %676 = vmatprep.subr.mxu0 0.0
      %677 = vmatpush1.msra.mxu0 0.0
      %678 = vmatprep.subr.mxu0 0.0
      %679 = vmatpush1.msra.mxu0 0.0
      %680 = vmatprep.subr.mxu0 0.0
      %681 = vmatpush1.msra.mxu0 0.0
      %682 = vmatprep.subr.mxu0 0.0
      %683 = vmatpush1.msra.mxu0 0.0
      %684 = vmatprep.subr.mxu0 0.0
      %685 = vmatpush1.msra.mxu0 0.0
      %686 = vmatprep.subr.mxu0 0.0
      %687 = vmatpush1.msra.mxu0 0.0
      %688 = vmatprep.subr.mxu0 0.0
      %689 = vmatpush1.msra.mxu0 0.0
      %690 = vmatprep.subr.mxu0 0.0
      %691 = vmatpush1.msra.mxu0 0.0
      %692 = vmatprep.mubr.f32.mxu0 0.0
      %693 = vmatmul.mubr.f32.gmra.mrb[0].mxu0 %v620
      %v694 = vpop.f32.mrb[0].mxu0
      %v695 = vadd.f32 0.0, %v694
      %v696 = vpop.f32.mrb[0].mxu0
      %v697 = vadd.f32 0.0, %v696
      %698 = vdwg.mxu0
      %v701 = vcombine.low %v695, %v697
      %v703 = vunpack.c.l.s4 1983009808
      %v704 = vunpack.c.0.s8 %v703
      %v705 = vlaneseq
      %v706 = vshrl.u32 %v705, 7
      %v707 = vsub.s32 %v704, %v706
      %v708 = vrot.slane %v701, %v707
      %v710 = vadd.f32 %v617, %v708
      %s711 = smul.u32 %s613, 4
      %s712 = smul.addr %s711, 2
      %s713 = scalar_lea.vmem [#allocation2], %s712
      %v714 = vld [vmem:[%s713] sm:$0xff]
      %v716 = vsel %vm618, %v611, 0
      %v719 = vsel %vm185, %v601, 0
      %v722 = vsel %vm185, %v602, 0
      %724 = vmatprep.subr.mxu0 %v588
      %725 = vmatpush1.msra.mxu0 %v587
      %726 = vmatprep.subr.mxu0 %v590
      %727 = vmatpush1.msra.mxu0 %v589
      %728 = vmatprep.subr.mxu0 %v592
      %729 = vmatpush1.msra.mxu0 %v591
      %730 = vmatprep.subr.mxu0 %v594
      %731 = vmatpush1.msra.mxu0 %v593
      %732 = vmatprep.subr.mxu0 %v596
      %733 = vmatpush1.msra.mxu0 %v595
      %734 = vmatprep.subr.mxu0 %v598
      %735 = vmatpush1.msra.mxu0 %v597
      %736 = vmatprep.subr.mxu0 %v600
      %737 = vmatpush1.msra.mxu0 %v599
      %738 = vmatprep.subr.mxu0 %v722
      %739 = vmatpush1.msra.mxu0 %v719
      %740 = vmatprep.subr.mxu0 0.0
      %741 = vmatpush1.msra.mxu0 0.0
      %742 = vmatprep.subr.mxu0 0.0
      %743 = vmatpush1.msra.mxu0 0.0
      %744 = vmatprep.subr.mxu0 0.0
      %745 = vmatpush1.msra.mxu0 0.0
      %746 = vmatprep.subr.mxu0 0.0
      %747 = vmatpush1.msra.mxu0 0.0
      %748 = vmatprep.subr.mxu0 0.0
      %749 = vmatpush1.msra.mxu0 0.0
      %750 = vmatprep.subr.mxu0 0.0
      %751 = vmatpush1.msra.mxu0 0.0
      %752 = vmatprep.subr.mxu0 0.0
      %753 = vmatpush1.msra.mxu0 0.0
      %754 = vmatprep.subr.mxu0 0.0
      %755 = vmatpush1.msra.mxu0 0.0
      %756 = vmatprep.subr.mxu0 0.0
      %757 = vmatpush1.msra.mxu0 0.0
      %758 = vmatprep.subr.mxu0 0.0
      %759 = vmatpush1.msra.mxu0 0.0
      %760 = vmatprep.subr.mxu0 0.0
      %761 = vmatpush1.msra.mxu0 0.0
      %762 = vmatprep.subr.mxu0 0.0
      %763 = vmatpush1.msra.mxu0 0.0
      %764 = vmatprep.subr.mxu0 0.0
      %765 = vmatpush1.msra.mxu0 0.0
      %766 = vmatprep.subr.mxu0 0.0
      %767 = vmatpush1.msra.mxu0 0.0
      %768 = vmatprep.subr.mxu0 0.0
      %769 = vmatpush1.msra.mxu0 0.0
      %770 = vmatprep.subr.mxu0 0.0
      %771 = vmatpush1.msra.mxu0 0.0
      %772 = vmatprep.subr.mxu0 0.0
      %773 = vmatpush1.msra.mxu0 0.0
      %774 = vmatprep.subr.mxu0 0.0
      %775 = vmatpush1.msra.mxu0 0.0
      %776 = vmatprep.subr.mxu0 0.0
      %777 = vmatpush1.msra.mxu0 0.0
      %778 = vmatprep.subr.mxu0 0.0
      %779 = vmatpush1.msra.mxu0 0.0
      %780 = vmatprep.subr.mxu0 0.0
      %781 = vmatpush1.msra.mxu0 0.0
      %782 = vmatprep.subr.mxu0 0.0
      %783 = vmatpush1.msra.mxu0 0.0
      %784 = vmatprep.subr.mxu0 0.0
      %785 = vmatpush1.msra.mxu0 0.0
      %786 = vmatprep.subr.mxu0 0.0
      %787 = vmatpush1.msra.mxu0 0.0
      %788 = vmatprep.mubr.f32.mxu0 0.0
      %789 = vmatmul.mubr.f32.gmra.mrb[0].mxu0 %v716
      %v790 = vpop.f32.mrb[0].mxu0
      %v791 = vadd.f32 0.0, %v790
      %v792 = vpop.f32.mrb[0].mxu0
      %v793 = vadd.f32 0.0, %v792
      %794 = vdwg.mxu0
      %796 = vrot.lane.b32.xlu0 %v714, 16
      %v797 = vpop.permute.xlu0 %796
      %v798 = vrot.slane %v797, 2
      %v799 = vrot.slane %v797, 4
      %vm800 = vcmask 130048
      %v801 = vsel %vm800, %v798, %v799
      %v805 = vcombine.low %v791, %v793
      %v807 = vunpack.c.l.s4 1983009808
      %v808 = vunpack.c.0.s8 %v807
      %v809 = vlaneseq
      %v810 = vshrl.u32 %v809, 7
      %v811 = vsub.s32 %v808, %v810
      %v812 = vrot.slane %v805, %v811
      %v814 = vadd.f32 %v801, %v812
      %v815 = vxor.u32 %v710, 2147483648
      %v816 = vmul.f32 %v815, 1.442695
      %v817 = vpow.pop %v816
      %v818 = vadd.f32 %v817, 1.0
      %v819 = vrcp.pop %v818
      %v820 = vmul.f32 1.0, %v819
      %v821 = vtanh.pop %v710
      %823 = vrot.lane.b32.xlu0 %v710, 76
      %v824 = vpop.permute.xlu0 %823
      %v825 = vrot.slane %v824, 2
      %v827 = vxor.u32 %v825, 2147483648
      %v828 = vmul.f32 %v827, 1.442695
      %v829 = vpow.pop %v828
      %v830 = vadd.f32 %v829, 1.0
      %v831 = vrcp.pop %v830
      %v832 = vmul.f32 1.0, %v831
      %v833 = vmul.f32 %v820, %v610
      %835 = vrot.lane.b32.xlu0 %v821, 8
      %v836 = vpop.permute.xlu0 %835
      %v837 = vrot.slane %v836, 2
      %vm838 = vcmask 64512
      %v839 = vsel %vm838, %v836, %v837
      %v841 = vmul.f32 %v820, %v839
      %843 = vrot.lane.b32.xlu0 %v841, 60
      %v844 = vpop.permute.xlu0 %843
      %v846 = vadd.f32 %v833, %v844
      %v847 = vtanh.pop %v846
      %849 = vrot.lane.b32.xlu0 %v847, 68
      %v850 = vpop.permute.xlu0 %849
      %v852 = vmul.f32 %v832, %v850
      %v853 = vxor.u32 %v814, 2147483648
      %v854 = vmul.f32 %v853, 1.442695
      %v855 = vpow.pop %v854
      %v856 = vadd.f32 %v855, 1.0
      %v857 = vrcp.pop %v856
      %v858 = vmul.f32 1.0, %v857
      %v859 = vtanh.pop %v814
      %861 = vrot.lane.b32.xlu0 %v814, 76
      %v862 = vpop.permute.xlu0 %861
      %v863 = vrot.slane %v862, 2
      %v865 = vxor.u32 %v863, 2147483648
      %v866 = vmul.f32 %v865, 1.442695
      %v867 = vpow.pop %v866
      %v868 = vadd.f32 %v867, 1.0
      %v869 = vrcp.pop %v868
      %v870 = vmul.f32 1.0, %v869
      %v871 = vmul.f32 %v858, %v612
      %873 = vrot.lane.b32.xlu0 %v859, 8
      %v874 = vpop.permute.xlu0 %873
      %v875 = vrot.slane %v874, 2
      %v876 = vsel %vm838, %v874, %v875
      %v878 = vmul.f32 %v858, %v876
      %880 = vrot.lane.b32.xlu0 %v878, 60
      %v881 = vpop.permute.xlu0 %880
      %v883 = vadd.f32 %v871, %v881
      %v884 = vtanh.pop %v883
      %886 = vrot.lane.b32.xlu0 %v884, 68
      %v887 = vpop.permute.xlu0 %886
      %v889 = vmul.f32 %v870, %v887
      %s890 = smul.u32 %s604, 2
      %s891 = scalar_lea.vmem [#allocation3], %s890
      %vm892 = vcmask 484352
      %893 = vst.msk [vmem:[%s891] sm:$0x3] %vm892, %v852
      %s894 = smul.u32 %s613, 2
      %s895 = scalar_lea.vmem [#allocation4], %s894
      %896 = vst.msk [vmem:[%s895] sm:$0x3] %vm892, %v889
    $region34: #{fel_bilstm_forward.3} parent=1 // loop_footer
      %s608 = sadd.s32 1, %s604
    $region35: #{fel_bilstm_forward.3} parent=1 // loop_footer_branch
      %603 = sbr.rel target = $region31
    $region36: #{fel_bilstm_forward.3} parent=1 // loop_exit
      _
    %v897 = vld [vmem:[#allocation3] sm:$0x3]
    %v898 = vld [vmem:[#allocation3 + $0x2] sm:$0x3]
    %v899 = vld [vmem:[#allocation3 + $0x4] sm:$0x3]
    %v900 = vld [vmem:[#allocation3 + $0x6] sm:$0x3]
    %v901 = vld [vmem:[#allocation3 + $0x8] sm:$0x3]
    %v902 = vld [vmem:[#allocation3 + $0xa] sm:$0x3]
    %v903 = vld [vmem:[#allocation3 + $0xc] sm:$0x3]
    %v904 = vld [vmem:[#allocation3 + $0xe] sm:$0x3]
    %v905 = vld [vmem:[#allocation3 + $0x10] sm:$0x3]
    %v906 = vld [vmem:[#allocation3 + $0x12] sm:$0x3]
    %v907 = vld [vmem:[#allocation3 + $0x14] sm:$0x3]
    %v908 = vld [vmem:[#allocation3 + $0x16] sm:$0x3]
    %v909 = vld [vmem:[#allocation3 + $0x18] sm:$0x3]
    %v910 = vld [vmem:[#allocation3 + $0x1a] sm:$0x3]
    %v911 = vld [vmem:[#allocation3 + $0x1c] sm:$0x3]
    %v912 = vld [vmem:[#allocation3 + $0x1e] sm:$0x3]
    %vm913 = vcmask 484352
    %914 = vst.msk [vmem:[%s5] sm:$0x3] %vm913, %v897
    %915 = vst.msk [vmem:[%s5 + $0x2] sm:$0x3] %vm913, %v898
    %916 = vst.msk [vmem:[%s5 + $0x4] sm:$0x3] %vm913, %v899
    %917 = vst.msk [vmem:[%s5 + $0x6] sm:$0x3] %vm913, %v900
    %918 = vst.msk [vmem:[%s5 + $0x8] sm:$0x3] %vm913, %v901
    %919 = vst.msk [vmem:[%s5 + $0xa] sm:$0x3] %vm913, %v902
    %920 = vst.msk [vmem:[%s5 + $0xc] sm:$0x3] %vm913, %v903
    %921 = vst.msk [vmem:[%s5 + $0xe] sm:$0x3] %vm913, %v904
    %922 = vst.msk [vmem:[%s5 + $0x10] sm:$0x3] %vm913, %v905
    %923 = vst.msk [vmem:[%s5 + $0x12] sm:$0x3] %vm913, %v906
    %924 = vst.msk [vmem:[%s5 + $0x14] sm:$0x3] %vm913, %v907
    %925 = vst.msk [vmem:[%s5 + $0x16] sm:$0x3] %vm913, %v908
    %926 = vst.msk [vmem:[%s5 + $0x18] sm:$0x3] %vm913, %v909
    %927 = vst.msk [vmem:[%s5 + $0x1a] sm:$0x3] %vm913, %v910
    %928 = vst.msk [vmem:[%s5 + $0x1c] sm:$0x3] %vm913, %v911
    %929 = vst.msk [vmem:[%s5 + $0x1e] sm:$0x3] %vm913, %v912
    %v930 = vld [vmem:[#allocation4] sm:$0x3]
    %v931 = vld [vmem:[#allocation4 + $0x2] sm:$0x3]
    %v932 = vld [vmem:[#allocation4 + $0x4] sm:$0x3]
    %v933 = vld [vmem:[#allocation4 + $0x6] sm:$0x3]
    %v934 = vld [vmem:[#allocation4 + $0x8] sm:$0x3]
    %v935 = vld [vmem:[#allocation4 + $0xa] sm:$0x3]
    %v936 = vld [vmem:[#allocation4 + $0xc] sm:$0x3]
    %v937 = vld [vmem:[#allocation4 + $0xe] sm:$0x3]
    %v938 = vld [vmem:[#allocation4 + $0x10] sm:$0x3]
    %v939 = vld [vmem:[#allocation4 + $0x12] sm:$0x3]
    %v940 = vld [vmem:[#allocation4 + $0x14] sm:$0x3]
    %v941 = vld [vmem:[#allocation4 + $0x16] sm:$0x3]
    %v942 = vld [vmem:[#allocation4 + $0x18] sm:$0x3]
    %v943 = vld [vmem:[#allocation4 + $0x1a] sm:$0x3]
    %v944 = vld [vmem:[#allocation4 + $0x1c] sm:$0x3]
    %v945 = vld [vmem:[#allocation4 + $0x1e] sm:$0x3]
    %962 = vrot.lane.b32.xlu0 %v930, 60
    %v963 = vpop.permute.xlu0 %962
    %964 = vrot.lane.b32.xlu0 %v931, 60
    %v965 = vpop.permute.xlu0 %964
    %966 = vrot.lane.b32.xlu0 %v932, 60
    %v967 = vpop.permute.xlu0 %966
    %968 = vrot.lane.b32.xlu0 %v933, 60
    %v969 = vpop.permute.xlu0 %968
    %970 = vrot.lane.b32.xlu0 %v934, 60
    %v971 = vpop.permute.xlu0 %970
    %972 = vrot.lane.b32.xlu0 %v935, 60
    %v973 = vpop.permute.xlu0 %972
    %974 = vrot.lane.b32.xlu0 %v936, 60
    %v975 = vpop.permute.xlu0 %974
    %976 = vrot.lane.b32.xlu0 %v937, 60
    %v977 = vpop.permute.xlu0 %976
    %978 = vrot.lane.b32.xlu0 %v938, 60
    %v979 = vpop.permute.xlu0 %978
    %980 = vrot.lane.b32.xlu0 %v939, 60
    %v981 = vpop.permute.xlu0 %980
    %982 = vrot.lane.b32.xlu0 %v940, 60
    %v983 = vpop.permute.xlu0 %982
    %984 = vrot.lane.b32.xlu0 %v941, 60
    %v985 = vpop.permute.xlu0 %984
    %986 = vrot.lane.b32.xlu0 %v942, 60
    %v987 = vpop.permute.xlu0 %986
    %988 = vrot.lane.b32.xlu0 %v943, 60
    %v989 = vpop.permute.xlu0 %988
    %990 = vrot.lane.b32.xlu0 %v944, 60
    %v991 = vpop.permute.xlu0 %990
    %992 = vrot.lane.b32.xlu0 %v945, 60
    %v993 = vpop.permute.xlu0 %992
    %vm1010 = vcmask 976352
    %1011 = vst.msk [vmem:[%s5] sm:$0x3] %vm1010, %v963
    %1012 = vst.msk [vmem:[%s5 + $0x2] sm:$0x3] %vm1010, %v965
    %1013 = vst.msk [vmem:[%s5 + $0x4] sm:$0x3] %vm1010, %v967
    %1014 = vst.msk [vmem:[%s5 + $0x6] sm:$0x3] %vm1010, %v969
    %1015 = vst.msk [vmem:[%s5 + $0x8] sm:$0x3] %vm1010, %v971
    %1016 = vst.msk [vmem:[%s5 + $0xa] sm:$0x3] %vm1010, %v973
    %1017 = vst.msk [vmem:[%s5 + $0xc] sm:$0x3] %vm1010, %v975
    %1018 = vst.msk [vmem:[%s5 + $0xe] sm:$0x3] %vm1010, %v977
    %1019 = vst.msk [vmem:[%s5 + $0x10] sm:$0x3] %vm1010, %v979
    %1020 = vst.msk [vmem:[%s5 + $0x12] sm:$0x3] %vm1010, %v981
    %1021 = vst.msk [vmem:[%s5 + $0x14] sm:$0x3] %vm1010, %v983
    %1022 = vst.msk [vmem:[%s5 + $0x16] sm:$0x3] %vm1010, %v985
    %1023 = vst.msk [vmem:[%s5 + $0x18] sm:$0x3] %vm1010, %v987
    %1024 = vst.msk [vmem:[%s5 + $0x1a] sm:$0x3] %vm1010, %v989
    %1025 = vst.msk [vmem:[%s5 + $0x1c] sm:$0x3] %vm1010, %v991
    %1026 = vst.msk [vmem:[%s5 + $0x1e] sm:$0x3] %vm1010, %v993
    // Predicated region
    $region37: #{fel_bilstm_forward.3} parent=1 // pred_check
      _
    $region38: #{fel_bilstm_forward.3} parent=1 // pred_check_branch
      %1028 = sbr.rel (0) target = $region40
    $region39: #{fel_bilstm_forward.3} parent=1 // pred_region
      _
    $region40: #{fel_bilstm_forward.3} parent=1 // pred_fallthru
      _
    // Predicated region
    $region41: #{fel_bilstm_forward.3} parent=1 // pred_check
      _
    $region42: #{fel_bilstm_forward.3} parent=1 // pred_check_branch
      %1030 = sbr.rel (0) target = $region44
    $region43: #{fel_bilstm_forward.3} parent=1 // pred_region
      _
    $region44: #{fel_bilstm_forward.3} parent=1 // pred_fallthru
      _
    %1031 = vsyncpa [#allocation6], 1
    %1032 = vsyncpa [#allocation8], 1

</llo_original>
